<compile_context>
chip_gen: v5e
topology: v5e:2x2
jax: 0.10.0
libtpu: 0.0.40
codegen_flags: <defaults>
</compile_context>

<pallas_src>
import jax
import jax.numpy as jnp
from jax.experimental import pallas as pl
from jax.experimental.pallas import tpu as pltpu

_LANE = 128
_SUBLANE = 8


def _lstm_mlp_kernel(x_ref,
                     wi0_ref, wh0_ref, b0_ref,
                     wi1_ref, wh1_ref, b1_ref,
                     wf1_ref, bf1_ref,
                     wf2_ref, bf2_ref,
                     wf3_ref, bf3_ref,
                     out_ref):
    TBp, D = x_ref.shape            # x is time-major, batch-padded, flattened: row t*Bp+b
    Bp = out_ref.shape[0]
    T = TBp // Bp
    H = wh0_ref.shape[0]
    G = 4 * H

    # Weight prep (gate reorder, bf16 cast, padding) already happened in the wrapper:
    # the kernel only loads pre-laid-out operands.
    wh0 = wh0_ref[...]              # (H, 4H) bf16
    wh1 = wh1_ref[...]              # (H, 4H) bf16
    wi1 = wi1_ref[...]              # (H, 4H) bf16
    # Hoisted broadcast: JAX does not CSE broadcast_in_dim, so do it once, not per step.
    b1b = jnp.broadcast_to(b1_ref[...], (Bp, G))

    # Hoisted layer-0 input projection: ONE bf16 MXU push over the whole sequence, bias folded,
    # f32 accumulate.  Reshape to (T, Bp, 4H): with Bp==8 and 4H==128 every per-step slab gx[t]
    # is exactly one (8,128) tile -> tile-aligned static index, no per-step sublane shuffle.
    gx = (jnp.dot(x_ref[...], wi0_ref[...], preferred_element_type=jnp.float32)
          + b0_ref[...]).reshape(T, Bp, G)

    def gate_act(gates):
        # Gate columns were reordered in the wrapper to (i, f, o | g): one sigmoid over 3H lanes
        # plus one tanh over H lanes — exactly the needed EUP work.
        sig = jax.nn.sigmoid(gates[:, :3 * H])
        g = jnp.tanh(gates[:, 3 * H:])
        # TODO(synk): the (Bp, H) sub-lane-tile extracts below are masked relayouts; a
        # pltpu.roll / lane-select full-width combine would move that work off the VPU path.
        return sig[:, :H], sig[:, H:2 * H], sig[:, 2 * H:3 * H], g

    h1 = jnp.zeros((Bp, H), jnp.bfloat16)
    c1 = jnp.zeros((Bp, H), jnp.float32)
    h2 = jnp.zeros((Bp, H), jnp.bfloat16)
    c2 = jnp.zeros((Bp, H), jnp.float32)
    h2f = jnp.zeros((Bp, H), jnp.float32)

    # T is small and static: full unroll gives the LLO scheduler cross-step visibility so the
    # independent recurrent pushes of step t+1 overlap the EUP/VPU tail of step t.
    for t in range(T):
        # Two INDEPENDENT recurrent MXU pushes (no block-diag fusion): rec0 depends only on
        # h1(t-1), which was ready well before h2(t-1), so it can issue early; no per-step
        # concat, no structurally-zero MAC columns.
        rec0 = jnp.dot(h1, wh0, preferred_element_type=jnp.float32)      # (Bp, 4H)
        rec1 = jnp.dot(h2, wh1, preferred_element_type=jnp.float32)      # (Bp, 4H)

        # ---- layer 0 (input projection precomputed; b0 already folded into gx) ----
        i0, f0, o0, g0 = gate_act(gx[t] + rec0)
        c1 = f0 * c1 + i0 * g0
        h1f = o0 * jnp.tanh(c1)
        h1 = h1f.astype(jnp.bfloat16)          # bf16 feed for the next MXU pushes

        # ---- layer 1 (inter-layer dropout is identity in eval mode) ----
        i1, f1, o1, g1 = gate_act(
            jnp.dot(h1, wi1, preferred_element_type=jnp.float32) + rec1 + b1b)
        c2 = f1 * c2 + i1 * g1
        h2f = o1 * jnp.tanh(c2)
        h2 = h2f.astype(jnp.bfloat16)

    # MLP head on the last timestep's top-layer hidden state (dropout = identity in eval).
    # Head weights / biases were zero-padded to 128 output lanes in the wrapper, so every
    # intermediate and the final store are full-lane (no masked vst).  Head stays f32: it is off
    # the serial recurrence path, so precision beats latency here.
    y = jnp.maximum(
        jnp.dot(h2f, wf1_ref[...], preferred_element_type=jnp.float32) + bf1_ref[...], 0.0)
    y = jnp.maximum(
        jnp.dot(y, wf2_ref[...], preferred_element_type=jnp.float32) + bf2_ref[...], 0.0)
    out_ref[...] = jnp.dot(y, wf3_ref[...], preferred_element_type=jnp.float32) + bf3_ref[...]


def _round_up(n, m):
    return ((n + m - 1) // m) * m


def _reorder_gates(w, axis=-1):
    # PyTorch gate column order (i, f, g, o) -> kernel order (i, f, o, g).
    i, f, g, o = jnp.split(w, 4, axis=axis)
    return jnp.concatenate([i, f, o, g], axis=axis)


def _pad_to(w, rows, cols):
    return jnp.pad(w, ((0, rows - w.shape[0]), (0, cols - w.shape[1])))


def lstm_model_forward(x, params):
    """Eval-mode forward of LSTMModel.  All layout plumbing (time-major transpose, batch padding
    to a sublane multiple, gate reorder, bf16 casts, lane-padding of the MLP head) lives here;
    the kernel sees pre-laid-out operands only."""
    B, T, D = x.shape
    out_dim = params["wf3"].shape[1]

    Bp = _round_up(B, _SUBLANE)                      # tile-aligned per-step batch slab
    # time-major + batch pad + flatten; bf16 feed for the hoisted MXU projection.
    x_tm = jnp.transpose(x, (1, 0, 2))
    x_tm = jnp.pad(x_tm, ((0, 0), (0, Bp - B), (0, 0)))
    x_tm = x_tm.reshape(T * Bp, D).astype(jnp.bfloat16)

    # LSTM weights: gate reorder + bf16 for the MXU (c-state / accumulation stay f32).
    wi0 = _reorder_gates(params["wi0"]).astype(jnp.bfloat16)
    wh0 = _reorder_gates(params["wh0"]).astype(jnp.bfloat16)
    b0 = _reorder_gates(params["b0"])
    wi1 = _reorder_gates(params["wi1"]).astype(jnp.bfloat16)
    wh1 = _reorder_gates(params["wh1"]).astype(jnp.bfloat16)
    b1 = _reorder_gates(params["b1"])

    # MLP head: zero-pad every output width (and fc2/fc3 input rows) to 128 lanes so the kernel's
    # intermediates and the output store are full-lane.  ReLU(0)=0 keeps the padding exact.
    wf1, bf1 = params["wf1"], params["bf1"]
    wf2, bf2 = params["wf2"], params["bf2"]
    wf3, bf3 = params["wf3"], params["bf3"]
    F1 = _round_up(wf1.shape[1], _LANE)
    F2 = _round_up(wf2.shape[1], _LANE)
    F3 = _round_up(out_dim, _LANE)
    wf1p = _pad_to(wf1, wf1.shape[0], F1)
    bf1p = _pad_to(bf1, 1, F1)
    wf2p = _pad_to(wf2, F1, F2)
    bf2p = _pad_to(bf2, 1, F2)
    wf3p = _pad_to(wf3, F2, F3)
    bf3p = _pad_to(bf3, 1, F3)

    vmem = pl.BlockSpec(memory_space=pltpu.MemorySpace.VMEM)
    # TODO(synk): for production B/T add a parallel batch grid (dimension_semantics=("parallel",))
    # to use both v7x TensorCores and stream x / gx per block from HBM instead of full VMEM
    # residency (v7x has only 64 MiB VMEM, halving the viable T*B for a fully-resident gx hoist).
    out = pl.pallas_call(
        _lstm_mlp_kernel,
        out_shape=jax.ShapeDtypeStruct((Bp, F3), jnp.float32),
        in_specs=[vmem] * 13,
        out_specs=vmem,
    )(x_tm, wi0, wh0, b0, wi1, wh1, b1, wf1p, bf1p, wf2p, bf2p, wf3p, bf3p)
    return out[:B, :out_dim]


def init_params(key, input_dim, hidden_dim, output_dim):
    """Deterministic init matching nn.LSTM / nn.Linear shapes (uniform(-1/sqrt(fan), 1/sqrt(fan))).
    Weights are stored transposed ((in, out)) in the native PyTorch gate order (i, f, g, o);
    the wrapper does the kernel-facing reorder / casts / padding."""
    H = hidden_dim
    ks = list(jax.random.split(key, 20))

    def u(k, shape, bound):
        return jax.random.uniform(k, shape, jnp.float32, -bound, bound)

    bh = 1.0 / jnp.sqrt(jnp.float32(H))
    # LSTM layer 0: weight_ih_l0 (4H, D), weight_hh_l0 (4H, H), biases (4H,) -- stored transposed.
    wi0 = u(ks[0], (input_dim, 4 * H), bh)
    wh0 = u(ks[1], (H, 4 * H), bh)
    b0 = (u(ks[2], (1, 4 * H), bh) + u(ks[3], (1, 4 * H), bh))    # bias_ih + bias_hh
    # LSTM layer 1: weight_ih_l1 (4H, H), weight_hh_l1 (4H, H).
    wi1 = u(ks[4], (H, 4 * H), bh)
    wh1 = u(ks[5], (H, 4 * H), bh)
    b1 = (u(ks[6], (1, 4 * H), bh) + u(ks[7], (1, 4 * H), bh))
    # fc1: (64, H), fc2: (32, 64), fc3: (out, 32) -- stored transposed.
    b1f = 1.0 / jnp.sqrt(jnp.float32(H))
    b2f = 1.0 / jnp.sqrt(jnp.float32(64))
    b3f = 1.0 / jnp.sqrt(jnp.float32(32))
    wf1 = u(ks[8], (H, 64), b1f);   bf1 = u(ks[9], (1, 64), b1f)
    wf2 = u(ks[10], (64, 32), b2f); bf2 = u(ks[11], (1, 32), b2f)
    wf3 = u(ks[12], (32, output_dim), b3f); bf3 = u(ks[13], (1, output_dim), b3f)
    return dict(wi0=wi0, wh0=wh0, b0=b0, wi1=wi1, wh1=wh1, b1=b1,
                wf1=wf1, bf1=bf1, wf2=wf2, bf2=bf2, wf3=wf3, bf3=bf3)


if __name__ == "__main__":
    B, T, D, H, OUT = 2, 8, 4, 32, 2

    key = jax.random.PRNGKey(0)
    k_x, k_p = jax.random.split(key)
    x = jax.random.normal(k_x, (B, T, D), jnp.float32)
    params = init_params(k_p, D, H, OUT)

    forward = jax.jit(lstm_model_forward)
    out = forward(x, params)
    jax.block_until_ready(out)
    assert out.shape == (B, OUT) and out.dtype == jnp.float32
    print("KERNEL_OK")
</pallas_src>

<mosaic_0001>
module attributes {stable_mosaic.version = 11 : i64} {
  func.func @_lstm_mlp_kernel(%arg0: memref<64x4xbf16, #tpu.memory_space<vmem>>, %arg1: memref<4x128xbf16, #tpu.memory_space<vmem>>, %arg2: memref<32x128xbf16, #tpu.memory_space<vmem>>, %arg3: memref<1x128xf32, #tpu.memory_space<vmem>>, %arg4: memref<32x128xbf16, #tpu.memory_space<vmem>>, %arg5: memref<32x128xbf16, #tpu.memory_space<vmem>>, %arg6: memref<1x128xf32, #tpu.memory_space<vmem>>, %arg7: memref<32x128xf32, #tpu.memory_space<vmem>>, %arg8: memref<1x128xf32, #tpu.memory_space<vmem>>, %arg9: memref<128x128xf32, #tpu.memory_space<vmem>>, %arg10: memref<1x128xf32, #tpu.memory_space<vmem>>, %arg11: memref<128x128xf32, #tpu.memory_space<vmem>>, %arg12: memref<1x128xf32, #tpu.memory_space<vmem>>, %arg13: memref<8x128xf32, #tpu.memory_space<vmem>>) attributes {dimension_semantics = [], scalar_prefetch = 0 : i64, scratch_operands = 0 : i64, tpu.core_type = #tpu.core_type<tc>} {
    %c0 = arith.constant 0 : index
    %c0_0 = arith.constant 0 : index
    %0 = vector.load %arg2[%c0, %c0_0] : memref<32x128xbf16, #tpu.memory_space<vmem>>, vector<32x128xbf16>
    %c0_1 = arith.constant 0 : index
    %c0_2 = arith.constant 0 : index
    %1 = vector.load %arg5[%c0_1, %c0_2] : memref<32x128xbf16, #tpu.memory_space<vmem>>, vector<32x128xbf16>
    %c0_3 = arith.constant 0 : index
    %c0_4 = arith.constant 0 : index
    %2 = vector.load %arg4[%c0_3, %c0_4] : memref<32x128xbf16, #tpu.memory_space<vmem>>, vector<32x128xbf16>
    %c0_5 = arith.constant 0 : index
    %c0_6 = arith.constant 0 : index
    %3 = vector.load %arg6[%c0_5, %c0_6] : memref<1x128xf32, #tpu.memory_space<vmem>>, vector<1x128xf32>
    %4 = vector.shape_cast %3 : vector<1x128xf32> to vector<1x128xf32>
    %5 = vector.broadcast %4 : vector<1x128xf32> to vector<8x128xf32>
    %c0_7 = arith.constant 0 : index
    %c0_8 = arith.constant 0 : index
    %6 = vector.load %arg0[%c0_7, %c0_8] : memref<64x4xbf16, #tpu.memory_space<vmem>>, vector<64x4xbf16>
    %c0_9 = arith.constant 0 : index
    %c0_10 = arith.constant 0 : index
    %7 = vector.load %arg1[%c0_9, %c0_10] : memref<4x128xbf16, #tpu.memory_space<vmem>>, vector<4x128xbf16>
    %cst = arith.constant dense<0.000000e+00> : vector<64x128xf32>
    %8 = tpu.matmul %6, %7, %cst {dimension_numbers = #tpu.dot_dimension_numbers<[1], [0], [0], [1], [0, 0, 1, 1], [], []>} : vector<64x4xbf16>, vector<4x128xbf16>, vector<64x128xf32> -> vector<64x128xf32>
    %c0_11 = arith.constant 0 : index
    %c0_12 = arith.constant 0 : index
    %9 = vector.load %arg3[%c0_11, %c0_12] : memref<1x128xf32, #tpu.memory_space<vmem>>, vector<1x128xf32>
    %10 = vector.broadcast %9 : vector<1x128xf32> to vector<64x128xf32>
    %11 = arith.addf %8, %10 : vector<64x128xf32>
    %12 = vector.shape_cast %11 : vector<64x128xf32> to vector<8x8x128xf32>
    %cst_13 = arith.constant 0.000000e+00 : bf16
    %13 = vector.broadcast %cst_13 : bf16 to vector<8x32xbf16>
    %cst_14 = arith.constant 0.000000e+00 : f32
    %14 = vector.broadcast %cst_14 : f32 to vector<8x32xf32>
    %cst_15 = arith.constant 0.000000e+00 : bf16
    %15 = vector.broadcast %cst_15 : bf16 to vector<8x32xbf16>
    %cst_16 = arith.constant 0.000000e+00 : f32
    %16 = vector.broadcast %cst_16 : f32 to vector<8x32xf32>
    %cst_17 = arith.constant dense<0.000000e+00> : vector<8x128xf32>
    %17 = tpu.matmul %13, %0, %cst_17 {dimension_numbers = #tpu.dot_dimension_numbers<[1], [0], [0], [1], [0, 0, 1, 1], [], []>} : vector<8x32xbf16>, vector<32x128xbf16>, vector<8x128xf32> -> vector<8x128xf32>
    %cst_18 = arith.constant dense<0.000000e+00> : vector<8x128xf32>
    %18 = tpu.matmul %15, %1, %cst_18 {dimension_numbers = #tpu.dot_dimension_numbers<[1], [0], [0], [1], [0, 0, 1, 1], [], []>} : vector<8x32xbf16>, vector<32x128xbf16>, vector<8x128xf32> -> vector<8x128xf32>
    %19 = vector.extract_strided_slice %12 {offsets = [0, 0, 0], sizes = [1, 8, 128], strides = [1, 1, 1]} : vector<8x8x128xf32> to vector<1x8x128xf32>
    %20 = vector.shape_cast %19 : vector<1x8x128xf32> to vector<8x128xf32>
    %21 = arith.addf %20, %17 : vector<8x128xf32>
    %22 = vector.extract_strided_slice %21 {offsets = [0, 0], sizes = [8, 96], strides = [1, 1]} : vector<8x128xf32> to vector<8x96xf32>
    %23 = arith.negf %22 : vector<8x96xf32>
    %24 = math.exp %23 : vector<8x96xf32>
    %cst_19 = arith.constant 1.000000e+00 : f32
    %25 = vector.broadcast %cst_19 : f32 to vector<8x96xf32>
    %26 = arith.addf %25, %24 : vector<8x96xf32>
    %27 = arith.divf %25, %26 : vector<8x96xf32>
    %28 = vector.extract_strided_slice %21 {offsets = [0, 96], sizes = [8, 32], strides = [1, 1]} : vector<8x128xf32> to vector<8x32xf32>
    %29 = math.tanh %28 : vector<8x32xf32>
    %30 = vector.extract_strided_slice %27 {offsets = [0, 0], sizes = [8, 32], strides = [1, 1]} : vector<8x96xf32> to vector<8x32xf32>
    %31 = vector.extract_strided_slice %27 {offsets = [0, 32], sizes = [8, 32], strides = [1, 1]} : vector<8x96xf32> to vector<8x32xf32>
    %32 = vector.extract_strided_slice %27 {offsets = [0, 64], sizes = [8, 32], strides = [1, 1]} : vector<8x96xf32> to vector<8x32xf32>
    %33 = arith.mulf %31, %14 : vector<8x32xf32>
    %34 = arith.mulf %30, %29 : vector<8x32xf32>
    %35 = arith.addf %33, %34 : vector<8x32xf32>
    %36 = math.tanh %35 : vector<8x32xf32>
    %37 = arith.mulf %32, %36 : vector<8x32xf32>
    %38 = arith.truncf %37 : vector<8x32xf32> to vector<8x32xbf16>
    %cst_20 = arith.constant dense<0.000000e+00> : vector<8x128xf32>
    %39 = tpu.matmul %38, %2, %cst_20 {dimension_numbers = #tpu.dot_dimension_numbers<[1], [0], [0], [1], [0, 0, 1, 1], [], []>} : vector<8x32xbf16>, vector<32x128xbf16>, vector<8x128xf32> -> vector<8x128xf32>
    %40 = arith.addf %39, %18 : vector<8x128xf32>
    %41 = arith.addf %40, %5 : vector<8x128xf32>
    %42 = vector.extract_strided_slice %41 {offsets = [0, 0], sizes = [8, 96], strides = [1, 1]} : vector<8x128xf32> to vector<8x96xf32>
    %43 = arith.negf %42 : vector<8x96xf32>
    %44 = math.exp %43 : vector<8x96xf32>
    %cst_21 = arith.constant 1.000000e+00 : f32
    %45 = vector.broadcast %cst_21 : f32 to vector<8x96xf32>
    %46 = arith.addf %45, %44 : vector<8x96xf32>
    %47 = arith.divf %45, %46 : vector<8x96xf32>
    %48 = vector.extract_strided_slice %41 {offsets = [0, 96], sizes = [8, 32], strides = [1, 1]} : vector<8x128xf32> to vector<8x32xf32>
    %49 = math.tanh %48 : vector<8x32xf32>
    %50 = vector.extract_strided_slice %47 {offsets = [0, 0], sizes = [8, 32], strides = [1, 1]} : vector<8x96xf32> to vector<8x32xf32>
    %51 = vector.extract_strided_slice %47 {offsets = [0, 32], sizes = [8, 32], strides = [1, 1]} : vector<8x96xf32> to vector<8x32xf32>
    %52 = vector.extract_strided_slice %47 {offsets = [0, 64], sizes = [8, 32], strides = [1, 1]} : vector<8x96xf32> to vector<8x32xf32>
    %53 = arith.mulf %51, %16 : vector<8x32xf32>
    %54 = arith.mulf %50, %49 : vector<8x32xf32>
    %55 = arith.addf %53, %54 : vector<8x32xf32>
    %56 = math.tanh %55 : vector<8x32xf32>
    %57 = arith.mulf %52, %56 : vector<8x32xf32>
    %58 = arith.truncf %57 : vector<8x32xf32> to vector<8x32xbf16>
    %cst_22 = arith.constant dense<0.000000e+00> : vector<8x128xf32>
    %59 = tpu.matmul %38, %0, %cst_22 {dimension_numbers = #tpu.dot_dimension_numbers<[1], [0], [0], [1], [0, 0, 1, 1], [], []>} : vector<8x32xbf16>, vector<32x128xbf16>, vector<8x128xf32> -> vector<8x128xf32>
    %cst_23 = arith.constant dense<0.000000e+00> : vector<8x128xf32>
    %60 = tpu.matmul %58, %1, %cst_23 {dimension_numbers = #tpu.dot_dimension_numbers<[1], [0], [0], [1], [0, 0, 1, 1], [], []>} : vector<8x32xbf16>, vector<32x128xbf16>, vector<8x128xf32> -> vector<8x128xf32>
    %61 = vector.extract_strided_slice %12 {offsets = [1, 0, 0], sizes = [1, 8, 128], strides = [1, 1, 1]} : vector<8x8x128xf32> to vector<1x8x128xf32>
    %62 = vector.shape_cast %61 : vector<1x8x128xf32> to vector<8x128xf32>
    %63 = arith.addf %62, %59 : vector<8x128xf32>
    %64 = vector.extract_strided_slice %63 {offsets = [0, 0], sizes = [8, 96], strides = [1, 1]} : vector<8x128xf32> to vector<8x96xf32>
    %65 = arith.negf %64 : vector<8x96xf32>
    %66 = math.exp %65 : vector<8x96xf32>
    %cst_24 = arith.constant 1.000000e+00 : f32
    %67 = vector.broadcast %cst_24 : f32 to vector<8x96xf32>
    %68 = arith.addf %67, %66 : vector<8x96xf32>
    %69 = arith.divf %67, %68 : vector<8x96xf32>
    %70 = vector.extract_strided_slice %63 {offsets = [0, 96], sizes = [8, 32], strides = [1, 1]} : vector<8x128xf32> to vector<8x32xf32>
    %71 = math.tanh %70 : vector<8x32xf32>
    %72 = vector.extract_strided_slice %69 {offsets = [0, 0], sizes = [8, 32], strides = [1, 1]} : vector<8x96xf32> to vector<8x32xf32>
    %73 = vector.extract_strided_slice %69 {offsets = [0, 32], sizes = [8, 32], strides = [1, 1]} : vector<8x96xf32> to vector<8x32xf32>
    %74 = vector.extract_strided_slice %69 {offsets = [0, 64], sizes = [8, 32], strides = [1, 1]} : vector<8x96xf32> to vector<8x32xf32>
    %75 = arith.mulf %73, %35 : vector<8x32xf32>
    %76 = arith.mulf %72, %71 : vector<8x32xf32>
    %77 = arith.addf %75, %76 : vector<8x32xf32>
    %78 = math.tanh %77 : vector<8x32xf32>
    %79 = arith.mulf %74, %78 : vector<8x32xf32>
    %80 = arith.truncf %79 : vector<8x32xf32> to vector<8x32xbf16>
    %cst_25 = arith.constant dense<0.000000e+00> : vector<8x128xf32>
    %81 = tpu.matmul %80, %2, %cst_25 {dimension_numbers = #tpu.dot_dimension_numbers<[1], [0], [0], [1], [0, 0, 1, 1], [], []>} : vector<8x32xbf16>, vector<32x128xbf16>, vector<8x128xf32> -> vector<8x128xf32>
    %82 = arith.addf %81, %60 : vector<8x128xf32>
    %83 = arith.addf %82, %5 : vector<8x128xf32>
    %84 = vector.extract_strided_slice %83 {offsets = [0, 0], sizes = [8, 96], strides = [1, 1]} : vector<8x128xf32> to vector<8x96xf32>
    %85 = arith.negf %84 : vector<8x96xf32>
    %86 = math.exp %85 : vector<8x96xf32>
    %cst_26 = arith.constant 1.000000e+00 : f32
    %87 = vector.broadcast %cst_26 : f32 to vector<8x96xf32>
    %88 = arith.addf %87, %86 : vector<8x96xf32>
    %89 = arith.divf %87, %88 : vector<8x96xf32>
    %90 = vector.extract_strided_slice %83 {offsets = [0, 96], sizes = [8, 32], strides = [1, 1]} : vector<8x128xf32> to vector<8x32xf32>
    %91 = math.tanh %90 : vector<8x32xf32>
    %92 = vector.extract_strided_slice %89 {offsets = [0, 0], sizes = [8, 32], strides = [1, 1]} : vector<8x96xf32> to vector<8x32xf32>
    %93 = vector.extract_strided_slice %89 {offsets = [0, 32], sizes = [8, 32], strides = [1, 1]} : vector<8x96xf32> to vector<8x32xf32>
    %94 = vector.extract_strided_slice %89 {offsets = [0, 64], sizes = [8, 32], strides = [1, 1]} : vector<8x96xf32> to vector<8x32xf32>
    %95 = arith.mulf %93, %55 : vector<8x32xf32>
    %96 = arith.mulf %92, %91 : vector<8x32xf32>
    %97 = arith.addf %95, %96 : vector<8x32xf32>
    %98 = math.tanh %97 : vector<8x32xf32>
    %99 = arith.mulf %94, %98 : vector<8x32xf32>
    %100 = arith.truncf %99 : vector<8x32xf32> to vector<8x32xbf16>
    %cst_27 = arith.constant dense<0.000000e+00> : vector<8x128xf32>
    %101 = tpu.matmul %80, %0, %cst_27 {dimension_numbers = #tpu.dot_dimension_numbers<[1], [0], [0], [1], [0, 0, 1, 1], [], []>} : vector<8x32xbf16>, vector<32x128xbf16>, vector<8x128xf32> -> vector<8x128xf32>
    %cst_28 = arith.constant dense<0.000000e+00> : vector<8x128xf32>
    %102 = tpu.matmul %100, %1, %cst_28 {dimension_numbers = #tpu.dot_dimension_numbers<[1], [0], [0], [1], [0, 0, 1, 1], [], []>} : vector<8x32xbf16>, vector<32x128xbf16>, vector<8x128xf32> -> vector<8x128xf32>
    %103 = vector.extract_strided_slice %12 {offsets = [2, 0, 0], sizes = [1, 8, 128], strides = [1, 1, 1]} : vector<8x8x128xf32> to vector<1x8x128xf32>
    %104 = vector.shape_cast %103 : vector<1x8x128xf32> to vector<8x128xf32>
    %105 = arith.addf %104, %101 : vector<8x128xf32>
    %106 = vector.extract_strided_slice %105 {offsets = [0, 0], sizes = [8, 96], strides = [1, 1]} : vector<8x128xf32> to vector<8x96xf32>
    %107 = arith.negf %106 : vector<8x96xf32>
    %108 = math.exp %107 : vector<8x96xf32>
    %cst_29 = arith.constant 1.000000e+00 : f32
    %109 = vector.broadcast %cst_29 : f32 to vector<8x96xf32>
    %110 = arith.addf %109, %108 : vector<8x96xf32>
    %111 = arith.divf %109, %110 : vector<8x96xf32>
    %112 = vector.extract_strided_slice %105 {offsets = [0, 96], sizes = [8, 32], strides = [1, 1]} : vector<8x128xf32> to vector<8x32xf32>
    %113 = math.tanh %112 : vector<8x32xf32>
    %114 = vector.extract_strided_slice %111 {offsets = [0, 0], sizes = [8, 32], strides = [1, 1]} : vector<8x96xf32> to vector<8x32xf32>
    %115 = vector.extract_strided_slice %111 {offsets = [0, 32], sizes = [8, 32], strides = [1, 1]} : vector<8x96xf32> to vector<8x32xf32>
    %116 = vector.extract_strided_slice %111 {offsets = [0, 64], sizes = [8, 32], strides = [1, 1]} : vector<8x96xf32> to vector<8x32xf32>
    %117 = arith.mulf %115, %77 : vector<8x32xf32>
    %118 = arith.mulf %114, %113 : vector<8x32xf32>
    %119 = arith.addf %117, %118 : vector<8x32xf32>
    %120 = math.tanh %119 : vector<8x32xf32>
    %121 = arith.mulf %116, %120 : vector<8x32xf32>
    %122 = arith.truncf %121 : vector<8x32xf32> to vector<8x32xbf16>
    %cst_30 = arith.constant dense<0.000000e+00> : vector<8x128xf32>
    %123 = tpu.matmul %122, %2, %cst_30 {dimension_numbers = #tpu.dot_dimension_numbers<[1], [0], [0], [1], [0, 0, 1, 1], [], []>} : vector<8x32xbf16>, vector<32x128xbf16>, vector<8x128xf32> -> vector<8x128xf32>
    %124 = arith.addf %123, %102 : vector<8x128xf32>
    %125 = arith.addf %124, %5 : vector<8x128xf32>
    %126 = vector.extract_strided_slice %125 {offsets = [0, 0], sizes = [8, 96], strides = [1, 1]} : vector<8x128xf32> to vector<8x96xf32>
    %127 = arith.negf %126 : vector<8x96xf32>
    %128 = math.exp %127 : vector<8x96xf32>
    %cst_31 = arith.constant 1.000000e+00 : f32
    %129 = vector.broadcast %cst_31 : f32 to vector<8x96xf32>
    %130 = arith.addf %129, %128 : vector<8x96xf32>
    %131 = arith.divf %129, %130 : vector<8x96xf32>
    %132 = vector.extract_strided_slice %125 {offsets = [0, 96], sizes = [8, 32], strides = [1, 1]} : vector<8x128xf32> to vector<8x32xf32>
    %133 = math.tanh %132 : vector<8x32xf32>
    %134 = vector.extract_strided_slice %131 {offsets = [0, 0], sizes = [8, 32], strides = [1, 1]} : vector<8x96xf32> to vector<8x32xf32>
    %135 = vector.extract_strided_slice %131 {offsets = [0, 32], sizes = [8, 32], strides = [1, 1]} : vector<8x96xf32> to vector<8x32xf32>
    %136 = vector.extract_strided_slice %131 {offsets = [0, 64], sizes = [8, 32], strides = [1, 1]} : vector<8x96xf32> to vector<8x32xf32>
    %137 = arith.mulf %135, %97 : vector<8x32xf32>
    %138 = arith.mulf %134, %133 : vector<8x32xf32>
    %139 = arith.addf %137, %138 : vector<8x32xf32>
    %140 = math.tanh %139 : vector<8x32xf32>
    %141 = arith.mulf %136, %140 : vector<8x32xf32>
    %142 = arith.truncf %141 : vector<8x32xf32> to vector<8x32xbf16>
    %cst_32 = arith.constant dense<0.000000e+00> : vector<8x128xf32>
    %143 = tpu.matmul %122, %0, %cst_32 {dimension_numbers = #tpu.dot_dimension_numbers<[1], [0], [0], [1], [0, 0, 1, 1], [], []>} : vector<8x32xbf16>, vector<32x128xbf16>, vector<8x128xf32> -> vector<8x128xf32>
    %cst_33 = arith.constant dense<0.000000e+00> : vector<8x128xf32>
    %144 = tpu.matmul %142, %1, %cst_33 {dimension_numbers = #tpu.dot_dimension_numbers<[1], [0], [0], [1], [0, 0, 1, 1], [], []>} : vector<8x32xbf16>, vector<32x128xbf16>, vector<8x128xf32> -> vector<8x128xf32>
    %145 = vector.extract_strided_slice %12 {offsets = [3, 0, 0], sizes = [1, 8, 128], strides = [1, 1, 1]} : vector<8x8x128xf32> to vector<1x8x128xf32>
    %146 = vector.shape_cast %145 : vector<1x8x128xf32> to vector<8x128xf32>
    %147 = arith.addf %146, %143 : vector<8x128xf32>
    %148 = vector.extract_strided_slice %147 {offsets = [0, 0], sizes = [8, 96], strides = [1, 1]} : vector<8x128xf32> to vector<8x96xf32>
    %149 = arith.negf %148 : vector<8x96xf32>
    %150 = math.exp %149 : vector<8x96xf32>
    %cst_34 = arith.constant 1.000000e+00 : f32
    %151 = vector.broadcast %cst_34 : f32 to vector<8x96xf32>
    %152 = arith.addf %151, %150 : vector<8x96xf32>
    %153 = arith.divf %151, %152 : vector<8x96xf32>
    %154 = vector.extract_strided_slice %147 {offsets = [0, 96], sizes = [8, 32], strides = [1, 1]} : vector<8x128xf32> to vector<8x32xf32>
    %155 = math.tanh %154 : vector<8x32xf32>
    %156 = vector.extract_strided_slice %153 {offsets = [0, 0], sizes = [8, 32], strides = [1, 1]} : vector<8x96xf32> to vector<8x32xf32>
    %157 = vector.extract_strided_slice %153 {offsets = [0, 32], sizes = [8, 32], strides = [1, 1]} : vector<8x96xf32> to vector<8x32xf32>
    %158 = vector.extract_strided_slice %153 {offsets = [0, 64], sizes = [8, 32], strides = [1, 1]} : vector<8x96xf32> to vector<8x32xf32>
    %159 = arith.mulf %157, %119 : vector<8x32xf32>
    %160 = arith.mulf %156, %155 : vector<8x32xf32>
    %161 = arith.addf %159, %160 : vector<8x32xf32>
    %162 = math.tanh %161 : vector<8x32xf32>
    %163 = arith.mulf %158, %162 : vector<8x32xf32>
    %164 = arith.truncf %163 : vector<8x32xf32> to vector<8x32xbf16>
    %cst_35 = arith.constant dense<0.000000e+00> : vector<8x128xf32>
    %165 = tpu.matmul %164, %2, %cst_35 {dimension_numbers = #tpu.dot_dimension_numbers<[1], [0], [0], [1], [0, 0, 1, 1], [], []>} : vector<8x32xbf16>, vector<32x128xbf16>, vector<8x128xf32> -> vector<8x128xf32>
    %166 = arith.addf %165, %144 : vector<8x128xf32>
    %167 = arith.addf %166, %5 : vector<8x128xf32>
    %168 = vector.extract_strided_slice %167 {offsets = [0, 0], sizes = [8, 96], strides = [1, 1]} : vector<8x128xf32> to vector<8x96xf32>
    %169 = arith.negf %168 : vector<8x96xf32>
    %170 = math.exp %169 : vector<8x96xf32>
    %cst_36 = arith.constant 1.000000e+00 : f32
    %171 = vector.broadcast %cst_36 : f32 to vector<8x96xf32>
    %172 = arith.addf %171, %170 : vector<8x96xf32>
    %173 = arith.divf %171, %172 : vector<8x96xf32>
    %174 = vector.extract_strided_slice %167 {offsets = [0, 96], sizes = [8, 32], strides = [1, 1]} : vector<8x128xf32> to vector<8x32xf32>
    %175 = math.tanh %174 : vector<8x32xf32>
    %176 = vector.extract_strided_slice %173 {offsets = [0, 0], sizes = [8, 32], strides = [1, 1]} : vector<8x96xf32> to vector<8x32xf32>
    %177 = vector.extract_strided_slice %173 {offsets = [0, 32], sizes = [8, 32], strides = [1, 1]} : vector<8x96xf32> to vector<8x32xf32>
    %178 = vector.extract_strided_slice %173 {offsets = [0, 64], sizes = [8, 32], strides = [1, 1]} : vector<8x96xf32> to vector<8x32xf32>
    %179 = arith.mulf %177, %139 : vector<8x32xf32>
    %180 = arith.mulf %176, %175 : vector<8x32xf32>
    %181 = arith.addf %179, %180 : vector<8x32xf32>
    %182 = math.tanh %181 : vector<8x32xf32>
    %183 = arith.mulf %178, %182 : vector<8x32xf32>
    %184 = arith.truncf %183 : vector<8x32xf32> to vector<8x32xbf16>
    %cst_37 = arith.constant dense<0.000000e+00> : vector<8x128xf32>
    %185 = tpu.matmul %164, %0, %cst_37 {dimension_numbers = #tpu.dot_dimension_numbers<[1], [0], [0], [1], [0, 0, 1, 1], [], []>} : vector<8x32xbf16>, vector<32x128xbf16>, vector<8x128xf32> -> vector<8x128xf32>
    %cst_38 = arith.constant dense<0.000000e+00> : vector<8x128xf32>
    %186 = tpu.matmul %184, %1, %cst_38 {dimension_numbers = #tpu.dot_dimension_numbers<[1], [0], [0], [1], [0, 0, 1, 1], [], []>} : vector<8x32xbf16>, vector<32x128xbf16>, vector<8x128xf32> -> vector<8x128xf32>
    %187 = vector.extract_strided_slice %12 {offsets = [4, 0, 0], sizes = [1, 8, 128], strides = [1, 1, 1]} : vector<8x8x128xf32> to vector<1x8x128xf32>
    %188 = vector.shape_cast %187 : vector<1x8x128xf32> to vector<8x128xf32>
    %189 = arith.addf %188, %185 : vector<8x128xf32>
    %190 = vector.extract_strided_slice %189 {offsets = [0, 0], sizes = [8, 96], strides = [1, 1]} : vector<8x128xf32> to vector<8x96xf32>
    %191 = arith.negf %190 : vector<8x96xf32>
    %192 = math.exp %191 : vector<8x96xf32>
    %cst_39 = arith.constant 1.000000e+00 : f32
    %193 = vector.broadcast %cst_39 : f32 to vector<8x96xf32>
    %194 = arith.addf %193, %192 : vector<8x96xf32>
    %195 = arith.divf %193, %194 : vector<8x96xf32>
    %196 = vector.extract_strided_slice %189 {offsets = [0, 96], sizes = [8, 32], strides = [1, 1]} : vector<8x128xf32> to vector<8x32xf32>
    %197 = math.tanh %196 : vector<8x32xf32>
    %198 = vector.extract_strided_slice %195 {offsets = [0, 0], sizes = [8, 32], strides = [1, 1]} : vector<8x96xf32> to vector<8x32xf32>
    %199 = vector.extract_strided_slice %195 {offsets = [0, 32], sizes = [8, 32], strides = [1, 1]} : vector<8x96xf32> to vector<8x32xf32>
    %200 = vector.extract_strided_slice %195 {offsets = [0, 64], sizes = [8, 32], strides = [1, 1]} : vector<8x96xf32> to vector<8x32xf32>
    %201 = arith.mulf %199, %161 : vector<8x32xf32>
    %202 = arith.mulf %198, %197 : vector<8x32xf32>
    %203 = arith.addf %201, %202 : vector<8x32xf32>
    %204 = math.tanh %203 : vector<8x32xf32>
    %205 = arith.mulf %200, %204 : vector<8x32xf32>
    %206 = arith.truncf %205 : vector<8x32xf32> to vector<8x32xbf16>
    %cst_40 = arith.constant dense<0.000000e+00> : vector<8x128xf32>
    %207 = tpu.matmul %206, %2, %cst_40 {dimension_numbers = #tpu.dot_dimension_numbers<[1], [0], [0], [1], [0, 0, 1, 1], [], []>} : vector<8x32xbf16>, vector<32x128xbf16>, vector<8x128xf32> -> vector<8x128xf32>
    %208 = arith.addf %207, %186 : vector<8x128xf32>
    %209 = arith.addf %208, %5 : vector<8x128xf32>
    %210 = vector.extract_strided_slice %209 {offsets = [0, 0], sizes = [8, 96], strides = [1, 1]} : vector<8x128xf32> to vector<8x96xf32>
    %211 = arith.negf %210 : vector<8x96xf32>
    %212 = math.exp %211 : vector<8x96xf32>
    %cst_41 = arith.constant 1.000000e+00 : f32
    %213 = vector.broadcast %cst_41 : f32 to vector<8x96xf32>
    %214 = arith.addf %213, %212 : vector<8x96xf32>
    %215 = arith.divf %213, %214 : vector<8x96xf32>
    %216 = vector.extract_strided_slice %209 {offsets = [0, 96], sizes = [8, 32], strides = [1, 1]} : vector<8x128xf32> to vector<8x32xf32>
    %217 = math.tanh %216 : vector<8x32xf32>
    %218 = vector.extract_strided_slice %215 {offsets = [0, 0], sizes = [8, 32], strides = [1, 1]} : vector<8x96xf32> to vector<8x32xf32>
    %219 = vector.extract_strided_slice %215 {offsets = [0, 32], sizes = [8, 32], strides = [1, 1]} : vector<8x96xf32> to vector<8x32xf32>
    %220 = vector.extract_strided_slice %215 {offsets = [0, 64], sizes = [8, 32], strides = [1, 1]} : vector<8x96xf32> to vector<8x32xf32>
    %221 = arith.mulf %219, %181 : vector<8x32xf32>
    %222 = arith.mulf %218, %217 : vector<8x32xf32>
    %223 = arith.addf %221, %222 : vector<8x32xf32>
    %224 = math.tanh %223 : vector<8x32xf32>
    %225 = arith.mulf %220, %224 : vector<8x32xf32>
    %226 = arith.truncf %225 : vector<8x32xf32> to vector<8x32xbf16>
    %cst_42 = arith.constant dense<0.000000e+00> : vector<8x128xf32>
    %227 = tpu.matmul %206, %0, %cst_42 {dimension_numbers = #tpu.dot_dimension_numbers<[1], [0], [0], [1], [0, 0, 1, 1], [], []>} : vector<8x32xbf16>, vector<32x128xbf16>, vector<8x128xf32> -> vector<8x128xf32>
    %cst_43 = arith.constant dense<0.000000e+00> : vector<8x128xf32>
    %228 = tpu.matmul %226, %1, %cst_43 {dimension_numbers = #tpu.dot_dimension_numbers<[1], [0], [0], [1], [0, 0, 1, 1], [], []>} : vector<8x32xbf16>, vector<32x128xbf16>, vector<8x128xf32> -> vector<8x128xf32>
    %229 = vector.extract_strided_slice %12 {offsets = [5, 0, 0], sizes = [1, 8, 128], strides = [1, 1, 1]} : vector<8x8x128xf32> to vector<1x8x128xf32>
    %230 = vector.shape_cast %229 : vector<1x8x128xf32> to vector<8x128xf32>
    %231 = arith.addf %230, %227 : vector<8x128xf32>
    %232 = vector.extract_strided_slice %231 {offsets = [0, 0], sizes = [8, 96], strides = [1, 1]} : vector<8x128xf32> to vector<8x96xf32>
    %233 = arith.negf %232 : vector<8x96xf32>
    %234 = math.exp %233 : vector<8x96xf32>
    %cst_44 = arith.constant 1.000000e+00 : f32
    %235 = vector.broadcast %cst_44 : f32 to vector<8x96xf32>
    %236 = arith.addf %235, %234 : vector<8x96xf32>
    %237 = arith.divf %235, %236 : vector<8x96xf32>
    %238 = vector.extract_strided_slice %231 {offsets = [0, 96], sizes = [8, 32], strides = [1, 1]} : vector<8x128xf32> to vector<8x32xf32>
    %239 = math.tanh %238 : vector<8x32xf32>
    %240 = vector.extract_strided_slice %237 {offsets = [0, 0], sizes = [8, 32], strides = [1, 1]} : vector<8x96xf32> to vector<8x32xf32>
    %241 = vector.extract_strided_slice %237 {offsets = [0, 32], sizes = [8, 32], strides = [1, 1]} : vector<8x96xf32> to vector<8x32xf32>
    %242 = vector.extract_strided_slice %237 {offsets = [0, 64], sizes = [8, 32], strides = [1, 1]} : vector<8x96xf32> to vector<8x32xf32>
    %243 = arith.mulf %241, %203 : vector<8x32xf32>
    %244 = arith.mulf %240, %239 : vector<8x32xf32>
    %245 = arith.addf %243, %244 : vector<8x32xf32>
    %246 = math.tanh %245 : vector<8x32xf32>
    %247 = arith.mulf %242, %246 : vector<8x32xf32>
    %248 = arith.truncf %247 : vector<8x32xf32> to vector<8x32xbf16>
    %cst_45 = arith.constant dense<0.000000e+00> : vector<8x128xf32>
    %249 = tpu.matmul %248, %2, %cst_45 {dimension_numbers = #tpu.dot_dimension_numbers<[1], [0], [0], [1], [0, 0, 1, 1], [], []>} : vector<8x32xbf16>, vector<32x128xbf16>, vector<8x128xf32> -> vector<8x128xf32>
    %250 = arith.addf %249, %228 : vector<8x128xf32>
    %251 = arith.addf %250, %5 : vector<8x128xf32>
    %252 = vector.extract_strided_slice %251 {offsets = [0, 0], sizes = [8, 96], strides = [1, 1]} : vector<8x128xf32> to vector<8x96xf32>
    %253 = arith.negf %252 : vector<8x96xf32>
    %254 = math.exp %253 : vector<8x96xf32>
    %cst_46 = arith.constant 1.000000e+00 : f32
    %255 = vector.broadcast %cst_46 : f32 to vector<8x96xf32>
    %256 = arith.addf %255, %254 : vector<8x96xf32>
    %257 = arith.divf %255, %256 : vector<8x96xf32>
    %258 = vector.extract_strided_slice %251 {offsets = [0, 96], sizes = [8, 32], strides = [1, 1]} : vector<8x128xf32> to vector<8x32xf32>
    %259 = math.tanh %258 : vector<8x32xf32>
    %260 = vector.extract_strided_slice %257 {offsets = [0, 0], sizes = [8, 32], strides = [1, 1]} : vector<8x96xf32> to vector<8x32xf32>
    %261 = vector.extract_strided_slice %257 {offsets = [0, 32], sizes = [8, 32], strides = [1, 1]} : vector<8x96xf32> to vector<8x32xf32>
    %262 = vector.extract_strided_slice %257 {offsets = [0, 64], sizes = [8, 32], strides = [1, 1]} : vector<8x96xf32> to vector<8x32xf32>
    %263 = arith.mulf %261, %223 : vector<8x32xf32>
    %264 = arith.mulf %260, %259 : vector<8x32xf32>
    %265 = arith.addf %263, %264 : vector<8x32xf32>
    %266 = math.tanh %265 : vector<8x32xf32>
    %267 = arith.mulf %262, %266 : vector<8x32xf32>
    %268 = arith.truncf %267 : vector<8x32xf32> to vector<8x32xbf16>
    %cst_47 = arith.constant dense<0.000000e+00> : vector<8x128xf32>
    %269 = tpu.matmul %248, %0, %cst_47 {dimension_numbers = #tpu.dot_dimension_numbers<[1], [0], [0], [1], [0, 0, 1, 1], [], []>} : vector<8x32xbf16>, vector<32x128xbf16>, vector<8x128xf32> -> vector<8x128xf32>
    %cst_48 = arith.constant dense<0.000000e+00> : vector<8x128xf32>
    %270 = tpu.matmul %268, %1, %cst_48 {dimension_numbers = #tpu.dot_dimension_numbers<[1], [0], [0], [1], [0, 0, 1, 1], [], []>} : vector<8x32xbf16>, vector<32x128xbf16>, vector<8x128xf32> -> vector<8x128xf32>
    %271 = vector.extract_strided_slice %12 {offsets = [6, 0, 0], sizes = [1, 8, 128], strides = [1, 1, 1]} : vector<8x8x128xf32> to vector<1x8x128xf32>
    %272 = vector.shape_cast %271 : vector<1x8x128xf32> to vector<8x128xf32>
    %273 = arith.addf %272, %269 : vector<8x128xf32>
    %274 = vector.extract_strided_slice %273 {offsets = [0, 0], sizes = [8, 96], strides = [1, 1]} : vector<8x128xf32> to vector<8x96xf32>
    %275 = arith.negf %274 : vector<8x96xf32>
    %276 = math.exp %275 : vector<8x96xf32>
    %cst_49 = arith.constant 1.000000e+00 : f32
    %277 = vector.broadcast %cst_49 : f32 to vector<8x96xf32>
    %278 = arith.addf %277, %276 : vector<8x96xf32>
    %279 = arith.divf %277, %278 : vector<8x96xf32>
    %280 = vector.extract_strided_slice %273 {offsets = [0, 96], sizes = [8, 32], strides = [1, 1]} : vector<8x128xf32> to vector<8x32xf32>
    %281 = math.tanh %280 : vector<8x32xf32>
    %282 = vector.extract_strided_slice %279 {offsets = [0, 0], sizes = [8, 32], strides = [1, 1]} : vector<8x96xf32> to vector<8x32xf32>
    %283 = vector.extract_strided_slice %279 {offsets = [0, 32], sizes = [8, 32], strides = [1, 1]} : vector<8x96xf32> to vector<8x32xf32>
    %284 = vector.extract_strided_slice %279 {offsets = [0, 64], sizes = [8, 32], strides = [1, 1]} : vector<8x96xf32> to vector<8x32xf32>
    %285 = arith.mulf %283, %245 : vector<8x32xf32>
    %286 = arith.mulf %282, %281 : vector<8x32xf32>
    %287 = arith.addf %285, %286 : vector<8x32xf32>
    %288 = math.tanh %287 : vector<8x32xf32>
    %289 = arith.mulf %284, %288 : vector<8x32xf32>
    %290 = arith.truncf %289 : vector<8x32xf32> to vector<8x32xbf16>
    %cst_50 = arith.constant dense<0.000000e+00> : vector<8x128xf32>
    %291 = tpu.matmul %290, %2, %cst_50 {dimension_numbers = #tpu.dot_dimension_numbers<[1], [0], [0], [1], [0, 0, 1, 1], [], []>} : vector<8x32xbf16>, vector<32x128xbf16>, vector<8x128xf32> -> vector<8x128xf32>
    %292 = arith.addf %291, %270 : vector<8x128xf32>
    %293 = arith.addf %292, %5 : vector<8x128xf32>
    %294 = vector.extract_strided_slice %293 {offsets = [0, 0], sizes = [8, 96], strides = [1, 1]} : vector<8x128xf32> to vector<8x96xf32>
    %295 = arith.negf %294 : vector<8x96xf32>
    %296 = math.exp %295 : vector<8x96xf32>
    %cst_51 = arith.constant 1.000000e+00 : f32
    %297 = vector.broadcast %cst_51 : f32 to vector<8x96xf32>
    %298 = arith.addf %297, %296 : vector<8x96xf32>
    %299 = arith.divf %297, %298 : vector<8x96xf32>
    %300 = vector.extract_strided_slice %293 {offsets = [0, 96], sizes = [8, 32], strides = [1, 1]} : vector<8x128xf32> to vector<8x32xf32>
    %301 = math.tanh %300 : vector<8x32xf32>
    %302 = vector.extract_strided_slice %299 {offsets = [0, 0], sizes = [8, 32], strides = [1, 1]} : vector<8x96xf32> to vector<8x32xf32>
    %303 = vector.extract_strided_slice %299 {offsets = [0, 32], sizes = [8, 32], strides = [1, 1]} : vector<8x96xf32> to vector<8x32xf32>
    %304 = vector.extract_strided_slice %299 {offsets = [0, 64], sizes = [8, 32], strides = [1, 1]} : vector<8x96xf32> to vector<8x32xf32>
    %305 = arith.mulf %303, %265 : vector<8x32xf32>
    %306 = arith.mulf %302, %301 : vector<8x32xf32>
    %307 = arith.addf %305, %306 : vector<8x32xf32>
    %308 = math.tanh %307 : vector<8x32xf32>
    %309 = arith.mulf %304, %308 : vector<8x32xf32>
    %310 = arith.truncf %309 : vector<8x32xf32> to vector<8x32xbf16>
    %cst_52 = arith.constant dense<0.000000e+00> : vector<8x128xf32>
    %311 = tpu.matmul %290, %0, %cst_52 {dimension_numbers = #tpu.dot_dimension_numbers<[1], [0], [0], [1], [0, 0, 1, 1], [], []>} : vector<8x32xbf16>, vector<32x128xbf16>, vector<8x128xf32> -> vector<8x128xf32>
    %cst_53 = arith.constant dense<0.000000e+00> : vector<8x128xf32>
    %312 = tpu.matmul %310, %1, %cst_53 {dimension_numbers = #tpu.dot_dimension_numbers<[1], [0], [0], [1], [0, 0, 1, 1], [], []>} : vector<8x32xbf16>, vector<32x128xbf16>, vector<8x128xf32> -> vector<8x128xf32>
    %313 = vector.extract_strided_slice %12 {offsets = [7, 0, 0], sizes = [1, 8, 128], strides = [1, 1, 1]} : vector<8x8x128xf32> to vector<1x8x128xf32>
    %314 = vector.shape_cast %313 : vector<1x8x128xf32> to vector<8x128xf32>
    %315 = arith.addf %314, %311 : vector<8x128xf32>
    %316 = vector.extract_strided_slice %315 {offsets = [0, 0], sizes = [8, 96], strides = [1, 1]} : vector<8x128xf32> to vector<8x96xf32>
    %317 = arith.negf %316 : vector<8x96xf32>
    %318 = math.exp %317 : vector<8x96xf32>
    %cst_54 = arith.constant 1.000000e+00 : f32
    %319 = vector.broadcast %cst_54 : f32 to vector<8x96xf32>
    %320 = arith.addf %319, %318 : vector<8x96xf32>
    %321 = arith.divf %319, %320 : vector<8x96xf32>
    %322 = vector.extract_strided_slice %315 {offsets = [0, 96], sizes = [8, 32], strides = [1, 1]} : vector<8x128xf32> to vector<8x32xf32>
    %323 = math.tanh %322 : vector<8x32xf32>
    %324 = vector.extract_strided_slice %321 {offsets = [0, 0], sizes = [8, 32], strides = [1, 1]} : vector<8x96xf32> to vector<8x32xf32>
    %325 = vector.extract_strided_slice %321 {offsets = [0, 32], sizes = [8, 32], strides = [1, 1]} : vector<8x96xf32> to vector<8x32xf32>
    %326 = vector.extract_strided_slice %321 {offsets = [0, 64], sizes = [8, 32], strides = [1, 1]} : vector<8x96xf32> to vector<8x32xf32>
    %327 = arith.mulf %325, %287 : vector<8x32xf32>
    %328 = arith.mulf %324, %323 : vector<8x32xf32>
    %329 = arith.addf %327, %328 : vector<8x32xf32>
    %330 = math.tanh %329 : vector<8x32xf32>
    %331 = arith.mulf %326, %330 : vector<8x32xf32>
    %332 = arith.truncf %331 : vector<8x32xf32> to vector<8x32xbf16>
    %cst_55 = arith.constant dense<0.000000e+00> : vector<8x128xf32>
    %333 = tpu.matmul %332, %2, %cst_55 {dimension_numbers = #tpu.dot_dimension_numbers<[1], [0], [0], [1], [0, 0, 1, 1], [], []>} : vector<8x32xbf16>, vector<32x128xbf16>, vector<8x128xf32> -> vector<8x128xf32>
    %334 = arith.addf %333, %312 : vector<8x128xf32>
    %335 = arith.addf %334, %5 : vector<8x128xf32>
    %336 = vector.extract_strided_slice %335 {offsets = [0, 0], sizes = [8, 96], strides = [1, 1]} : vector<8x128xf32> to vector<8x96xf32>
    %337 = arith.negf %336 : vector<8x96xf32>
    %338 = math.exp %337 : vector<8x96xf32>
    %cst_56 = arith.constant 1.000000e+00 : f32
    %339 = vector.broadcast %cst_56 : f32 to vector<8x96xf32>
    %340 = arith.addf %339, %338 : vector<8x96xf32>
    %341 = arith.divf %339, %340 : vector<8x96xf32>
    %342 = vector.extract_strided_slice %335 {offsets = [0, 96], sizes = [8, 32], strides = [1, 1]} : vector<8x128xf32> to vector<8x32xf32>
    %343 = math.tanh %342 : vector<8x32xf32>
    %344 = vector.extract_strided_slice %341 {offsets = [0, 0], sizes = [8, 32], strides = [1, 1]} : vector<8x96xf32> to vector<8x32xf32>
    %345 = vector.extract_strided_slice %341 {offsets = [0, 32], sizes = [8, 32], strides = [1, 1]} : vector<8x96xf32> to vector<8x32xf32>
    %346 = vector.extract_strided_slice %341 {offsets = [0, 64], sizes = [8, 32], strides = [1, 1]} : vector<8x96xf32> to vector<8x32xf32>
    %347 = arith.mulf %345, %307 : vector<8x32xf32>
    %348 = arith.mulf %344, %343 : vector<8x32xf32>
    %349 = arith.addf %347, %348 : vector<8x32xf32>
    %350 = math.tanh %349 : vector<8x32xf32>
    %351 = arith.mulf %346, %350 : vector<8x32xf32>
    %c0_57 = arith.constant 0 : index
    %c0_58 = arith.constant 0 : index
    %352 = vector.load %arg7[%c0_57, %c0_58] : memref<32x128xf32, #tpu.memory_space<vmem>>, vector<32x128xf32>
    %cst_59 = arith.constant dense<0.000000e+00> : vector<8x128xf32>
    %353 = tpu.matmul %351, %352, %cst_59 {dimension_numbers = #tpu.dot_dimension_numbers<[1], [0], [0], [1], [0, 0, 1, 1], [], []>} : vector<8x32xf32>, vector<32x128xf32>, vector<8x128xf32> -> vector<8x128xf32>
    %c0_60 = arith.constant 0 : index
    %c0_61 = arith.constant 0 : index
    %354 = vector.load %arg8[%c0_60, %c0_61] : memref<1x128xf32, #tpu.memory_space<vmem>>, vector<1x128xf32>
    %355 = vector.broadcast %354 : vector<1x128xf32> to vector<8x128xf32>
    %356 = arith.addf %353, %355 : vector<8x128xf32>
    %cst_62 = arith.constant 0.000000e+00 : f32
    %357 = vector.broadcast %cst_62 : f32 to vector<8x128xf32>
    %358 = arith.maximumf %356, %357 : vector<8x128xf32>
    %c0_63 = arith.constant 0 : index
    %c0_64 = arith.constant 0 : index
    %359 = vector.load %arg9[%c0_63, %c0_64] : memref<128x128xf32, #tpu.memory_space<vmem>>, vector<128x128xf32>
    %cst_65 = arith.constant dense<0.000000e+00> : vector<8x128xf32>
    %360 = tpu.matmul %358, %359, %cst_65 {dimension_numbers = #tpu.dot_dimension_numbers<[1], [0], [0], [1], [0, 0, 1, 1], [], []>} : vector<8x128xf32>, vector<128x128xf32>, vector<8x128xf32> -> vector<8x128xf32>
    %c0_66 = arith.constant 0 : index
    %c0_67 = arith.constant 0 : index
    %361 = vector.load %arg10[%c0_66, %c0_67] : memref<1x128xf32, #tpu.memory_space<vmem>>, vector<1x128xf32>
    %362 = vector.broadcast %361 : vector<1x128xf32> to vector<8x128xf32>
    %363 = arith.addf %360, %362 : vector<8x128xf32>
    %cst_68 = arith.constant 0.000000e+00 : f32
    %364 = vector.broadcast %cst_68 : f32 to vector<8x128xf32>
    %365 = arith.maximumf %363, %364 : vector<8x128xf32>
    %c0_69 = arith.constant 0 : index
    %c0_70 = arith.constant 0 : index
    %366 = vector.load %arg11[%c0_69, %c0_70] : memref<128x128xf32, #tpu.memory_space<vmem>>, vector<128x128xf32>
    %cst_71 = arith.constant dense<0.000000e+00> : vector<8x128xf32>
    %367 = tpu.matmul %365, %366, %cst_71 {dimension_numbers = #tpu.dot_dimension_numbers<[1], [0], [0], [1], [0, 0, 1, 1], [], []>} : vector<8x128xf32>, vector<128x128xf32>, vector<8x128xf32> -> vector<8x128xf32>
    %c0_72 = arith.constant 0 : index
    %c0_73 = arith.constant 0 : index
    %368 = vector.load %arg12[%c0_72, %c0_73] : memref<1x128xf32, #tpu.memory_space<vmem>>, vector<1x128xf32>
    %369 = vector.broadcast %368 : vector<1x128xf32> to vector<8x128xf32>
    %370 = arith.addf %367, %369 : vector<8x128xf32>
    %c0_74 = arith.constant 0 : index
    %c0_75 = arith.constant 0 : index
    %371 = vector.load %arg13[%c0_74, %c0_75] : memref<8x128xf32, #tpu.memory_space<vmem>>, vector<8x128xf32>
    tpu.vector_store %arg13[%c0_74, %c0_75], %370 {strides = array<i32>} : memref<8x128xf32, #tpu.memory_space<vmem>>, vector<8x128xf32>,
    return
  }
}

</mosaic_0001>

<llo_original>
// kernel: lstm_model_forward.1
$region0: #{lstm_model_forward.1}
  #allocation0 [shape = 'u32[]', space=smem, size = 0x4, offset = 0x4, fixed_abs, tag = 'smem constant byte address 0x4 - core index']
  #allocation1 [shape = 'u32[72,128]{1,0:T(1,128)}', space=vmem, size = 0x9000, scoped, tag = 'internal scratch']
  %s0 = inlined_call_operand.vmem [shape: bf16[64,4], index: 0, kind: input, shape index: {}]
  %s1 = inlined_call_operand.vmem [shape: bf16[4,128], index: 1, kind: input, shape index: {}]
  %s2 = inlined_call_operand.vmem [shape: bf16[32,128], index: 2, kind: input, shape index: {}]
  %s3 = inlined_call_operand.vmem [shape: f32[1,128], index: 3, kind: input, shape index: {}]
  %s4 = inlined_call_operand.vmem [shape: bf16[32,128], index: 4, kind: input, shape index: {}]
  %s5 = inlined_call_operand.vmem [shape: bf16[32,128], index: 5, kind: input, shape index: {}]
  %s6 = inlined_call_operand.vmem [shape: f32[1,128], index: 6, kind: input, shape index: {}]
  %s7 = inlined_call_operand.vmem [shape: f32[32,128], index: 7, kind: input, shape index: {}]
  %s8 = inlined_call_operand.vmem [shape: f32[1,128], index: 8, kind: input, shape index: {}]
  %s9 = inlined_call_operand.vmem [shape: f32[128,128], index: 9, kind: input, shape index: {}]
  %s10 = inlined_call_operand.vmem [shape: f32[1,128], index: 10, kind: input, shape index: {}]
  %s11 = inlined_call_operand.vmem [shape: f32[128,128], index: 11, kind: input, shape index: {}]
  %s12 = inlined_call_operand.vmem [shape: f32[1,128], index: 12, kind: input, shape index: {}]
  %s13 = inlined_call_operand.vmem [shape: f32[8,128], index: 13, kind: output, shape index: {}]
  %s14 = sld [smem:[#allocation0]]
  $region62: #{lstm_model_forward.1} parent=0
    _
  %s16 = ssub.s32 1, %s14
  %s17 = scalar_select 0, %s16, %s14
  // Predicated region
  $region2: #{lstm_model_forward.1} parent=0 // pred_check
    _
  $region3: #{lstm_model_forward.1} parent=0 // pred_check_branch
    %19 = sbr.rel (0) target = $region5
  $region4: #{lstm_model_forward.1} parent=0 // pred_region
    _
  $region5: #{lstm_model_forward.1} parent=0 // pred_fallthru
    _
  // Predicated region
  $region6: #{lstm_model_forward.1} parent=0 // pred_check
    _
  $region7: #{lstm_model_forward.1} parent=0 // pred_check_branch
    %21 = sbr.rel (0) target = $region9
  $region8: #{lstm_model_forward.1} parent=0 // pred_region
    _
  $region9: #{lstm_model_forward.1} parent=0 // pred_fallthru
    _
  // Predicated region
  $region10: #{lstm_model_forward.1} parent=0 // pred_check
    _
  $region11: #{lstm_model_forward.1} parent=0 // pred_check_branch
    %23 = sbr.rel (0) target = $region13
  $region12: #{lstm_model_forward.1} parent=0 // pred_region
    _
  $region13: #{lstm_model_forward.1} parent=0 // pred_fallthru
    _
  // Predicated region
  $region14: #{lstm_model_forward.1} parent=0 // pred_check
    _
  $region15: #{lstm_model_forward.1} parent=0 // pred_check_branch
    %25 = sbr.rel (0) target = $region17
  $region16: #{lstm_model_forward.1} parent=0 // pred_region
    _
  $region17: #{lstm_model_forward.1} parent=0 // pred_fallthru
    _
  // Predicated region
  $region18: #{lstm_model_forward.1} parent=0 // pred_check
    _
  $region19: #{lstm_model_forward.1} parent=0 // pred_check_branch
    %27 = sbr.rel (0) target = $region21
  $region20: #{lstm_model_forward.1} parent=0 // pred_region
    _
  $region21: #{lstm_model_forward.1} parent=0 // pred_fallthru
    _
  // Predicated region
  $region22: #{lstm_model_forward.1} parent=0 // pred_check
    _
  $region23: #{lstm_model_forward.1} parent=0 // pred_check_branch
    %29 = sbr.rel (0) target = $region25
  $region24: #{lstm_model_forward.1} parent=0 // pred_region
    _
  $region25: #{lstm_model_forward.1} parent=0 // pred_fallthru
    _
  // Predicated region
  $region26: #{lstm_model_forward.1} parent=0 // pred_check
    _
  $region27: #{lstm_model_forward.1} parent=0 // pred_check_branch
    %31 = sbr.rel (0) target = $region29
  $region28: #{lstm_model_forward.1} parent=0 // pred_region
    _
  $region29: #{lstm_model_forward.1} parent=0 // pred_fallthru
    _
  // Predicated region
  $region30: #{lstm_model_forward.1} parent=0 // pred_check
    _
  $region31: #{lstm_model_forward.1} parent=0 // pred_check_branch
    %33 = sbr.rel (0) target = $region33
  $region32: #{lstm_model_forward.1} parent=0 // pred_region
    _
  $region33: #{lstm_model_forward.1} parent=0 // pred_fallthru
    _
  // Predicated region
  $region34: #{lstm_model_forward.1} parent=0 // pred_check
    _
  $region35: #{lstm_model_forward.1} parent=0 // pred_check_branch
    %35 = sbr.rel (0) target = $region37
  $region36: #{lstm_model_forward.1} parent=0 // pred_region
    _
  $region37: #{lstm_model_forward.1} parent=0 // pred_fallthru
    _
  // Predicated region
  $region38: #{lstm_model_forward.1} parent=0 // pred_check
    _
  $region39: #{lstm_model_forward.1} parent=0 // pred_check_branch
    %37 = sbr.rel (0) target = $region41
  $region40: #{lstm_model_forward.1} parent=0 // pred_region
    _
  $region41: #{lstm_model_forward.1} parent=0 // pred_fallthru
    _
  // Predicated region
  $region42: #{lstm_model_forward.1} parent=0 // pred_check
    _
  $region43: #{lstm_model_forward.1} parent=0 // pred_check_branch
    %39 = sbr.rel (0) target = $region45
  $region44: #{lstm_model_forward.1} parent=0 // pred_region
    _
  $region45: #{lstm_model_forward.1} parent=0 // pred_fallthru
    _
  // Predicated region
  $region46: #{lstm_model_forward.1} parent=0 // pred_check
    _
  $region47: #{lstm_model_forward.1} parent=0 // pred_check_branch
    %41 = sbr.rel (0) target = $region49
  $region48: #{lstm_model_forward.1} parent=0 // pred_region
    _
  $region49: #{lstm_model_forward.1} parent=0 // pred_fallthru
    _
  // Predicated region
  $region50: #{lstm_model_forward.1} parent=0 // pred_check
    _
  $region51: #{lstm_model_forward.1} parent=0 // pred_check_branch
    %43 = sbr.rel (0) target = $region53
  $region52: #{lstm_model_forward.1} parent=0 // pred_region
    _
  $region53: #{lstm_model_forward.1} parent=0 // pred_fallthru
    _
  %v45 = vld [vmem:[%s2] sm:$0xf]
  %v46 = vld [vmem:[%s2 + $0x4] sm:$0xf]
  %v47 = vld [vmem:[%s2 + $0x8] sm:$0xf]
  %v48 = vld [vmem:[%s2 + $0xc] sm:$0xf]
  %v49 = vld [vmem:[%s5] sm:$0xf]
  %v50 = vld [vmem:[%s5 + $0x4] sm:$0xf]
  %v51 = vld [vmem:[%s5 + $0x8] sm:$0xf]
  %v52 = vld [vmem:[%s5 + $0xc] sm:$0xf]
  %v53 = vld [vmem:[%s4] sm:$0xf]
  %v54 = vld [vmem:[%s4 + $0x4] sm:$0xf]
  %v55 = vld [vmem:[%s4 + $0x8] sm:$0xf]
  %v56 = vld [vmem:[%s4 + $0xc] sm:$0xf]
  %v57 = vld [vmem:[%s6] sm:$0x1]
  %v59 = vperm.slane %v57, 0
  %v61 = vld [vmem:[%s0] sm:$0xf]
  %v62 = vld [vmem:[%s0 + $0x4] sm:$0xf]
  %v63 = vld [vmem:[%s0 + $0x8] sm:$0xf]
  %v64 = vld [vmem:[%s0 + $0xc] sm:$0xf]
  %v65 = vld [vmem:[%s0 + $0x10] sm:$0xf]
  %v66 = vld [vmem:[%s0 + $0x14] sm:$0xf]
  %v67 = vld [vmem:[%s0 + $0x18] sm:$0xf]
  %v68 = vld [vmem:[%s0 + $0x1c] sm:$0xf]
  %v69 = vld [vmem:[%s1] sm:$0x3]
  %v70 = vld [vmem:[%s3] sm:$0x1]
  %v72 = vperm.slane %v70, 0
  %v82 = vunpack.c.l.b16 %v61
  %v83 = vunpack.c.l.b16 %v62
  %v84 = vunpack.c.l.b16 %v63
  %v85 = vunpack.c.l.b16 %v64
  %v86 = vunpack.c.l.b16 %v65
  %v87 = vunpack.c.l.b16 %v66
  %v88 = vunpack.c.l.b16 %v67
  %v89 = vunpack.c.l.b16 %v68
  %v90 = vpack.c.b16 %v83, %v82
  %v91 = vpack.c.b16 %v85, %v84
  %v92 = vpack.c.b16 %v87, %v86
  %v93 = vpack.c.b16 %v89, %v88
  %vm94 = vcmask 31744
  %v96 = vsel %vm94, %v90, 0
  %v99 = vsel %vm94, %v91, 0
  %v102 = vsel %vm94, %v92, 0
  %v105 = vsel %vm94, %v93, 0
  %vm107 = vcmask 1041408
  %v109 = vsel %vm107, %v69, 0
  %111 = vmatpush.bf16.msra.mxu0 0
  %112 = vmatpush.bf16.msra.mxu0 0
  %113 = vmatpush.bf16.msra.mxu0 0
  %114 = vmatpush.bf16.msra.mxu0 0
  %115 = vmatpush.bf16.msra.mxu0 0
  %116 = vmatpush.bf16.msra.mxu0 0
  %117 = vmatpush.bf16.msra.mxu0 0
  %118 = vmatpush.bf16.msra.mxu0 %v109
  %119 = vmatmul.bf16.gmra.mxu0 %v96
  %v120 = vpop.f32.mrf.mxu0
  %v121 = vadd.f32 %v72, %v120
  %v122 = vpop.f32.mrf.mxu0
  %v123 = vadd.f32 %v72, %v122
  %124 = vmatmul.bf16.gmra.mxu0 %v99
  %v125 = vpop.f32.mrf.mxu0
  %v126 = vadd.f32 %v72, %v125
  %v127 = vpop.f32.mrf.mxu0
  %v128 = vadd.f32 %v72, %v127
  %129 = vmatmul.bf16.gmra.mxu0 %v102
  %v130 = vpop.f32.mrf.mxu0
  %v131 = vadd.f32 %v72, %v130
  %v132 = vpop.f32.mrf.mxu0
  %v133 = vadd.f32 %v72, %v132
  %134 = vmatmul.bf16.gmra.mxu0 %v105
  %v135 = vpop.f32.mrf.mxu0
  %v136 = vadd.f32 %v72, %v135
  %v137 = vpop.f32.mrf.mxu0
  %v138 = vadd.f32 %v72, %v137
  %139 = vdwg.mxu0
  %v144 = vunpack.c.l.b16 %v45
  %v145 = vunpack.c.l.b16 %v46
  %v146 = vunpack.c.l.b16 %v47
  %v147 = vunpack.c.l.b16 %v48
  %v148 = vpack.c.b16 %v145, %v144
  %v149 = vpack.c.b16 %v147, %v146
  %vm152 = vcmask 261120
  %v154 = vsel %vm152, 0, 0
  %156 = vmatpush.bf16.msra.mxu0 0
  %157 = vmatpush.bf16.msra.mxu0 0
  %158 = vmatpush.bf16.msra.mxu0 0
  %159 = vmatpush.bf16.msra.mxu0 0
  %160 = vmatpush.bf16.msra.mxu0 0
  %161 = vmatpush.bf16.msra.mxu0 0
  %162 = vmatpush.bf16.msra.mxu0 %v149
  %163 = vmatpush.bf16.msra.mxu0 %v148
  %164 = vmatmul.bf16.gmra.mxu0 %v154
  %v165 = vpop.f32.mrf.mxu0
  %v166 = vadd.f32 0.0, %v165
  %v167 = vpop.f32.mrf.mxu0
  %168 = vdwg.mxu0
  %v173 = vunpack.c.l.b16 %v49
  %v174 = vunpack.c.l.b16 %v50
  %v175 = vunpack.c.l.b16 %v51
  %v176 = vunpack.c.l.b16 %v52
  %v177 = vpack.c.b16 %v174, %v173
  %v178 = vpack.c.b16 %v176, %v175
  %181 = vmatpush.bf16.msra.mxu0 0
  %182 = vmatpush.bf16.msra.mxu0 0
  %183 = vmatpush.bf16.msra.mxu0 0
  %184 = vmatpush.bf16.msra.mxu0 0
  %185 = vmatpush.bf16.msra.mxu0 0
  %186 = vmatpush.bf16.msra.mxu0 0
  %187 = vmatpush.bf16.msra.mxu0 %v178
  %188 = vmatpush.bf16.msra.mxu0 %v177
  %189 = vmatmul.bf16.gmra.mxu0 %v154
  %v190 = vpop.f32.mrf.mxu0
  %v191 = vadd.f32 0.0, %v190
  %v192 = vpop.f32.mrf.mxu0
  %193 = vdwg.mxu0
  %v194 = vadd.f32 %v121, %v166
  %v195 = vxor.u32 %v194, 2147483648
  %v196 = vmul.f32 %v195, 1.442695
  %v197 = vpow.pop %v196
  %v198 = vadd.f32 %v197, 1.0
  %v199 = vrcp.pop %v198
  %v200 = vmul.f32 %v198, %v199
  %v201 = vsub.f32 1.0, %v200
  %v202 = vmul.f32 %v199, %v201
  %v203 = vadd.f32 %v199, %v202
  %vm204 = vweird.f32 %v198
  %vm205 = vweird.f32 %v199
  %vm206 = vmor %vm204, %vm205
  %v207 = vsel %vm206, %v199, %v203
  %v208 = vand.u32 2147483647, %v198
  %vm209 = vcmp.eq.f32.partialorder %v208, 8.507059e+37
  %v210 = vand.u32 %v198, 2147483648
  %v211 = vor.u32 1.1754944e-38, %v210
  %v212 = vsel %vm209, %v211, %v207
  %v213 = vmul.f32 1.0, %v212
  %v214 = vtanh.pop %v194
  %v215 = vmul.f32 %v213, 0.0
  %217 = vrot.lane.b32.xlu0 %v214, 32
  %v218 = vpop.permute.xlu0 %217
  %v220 = vmul.f32 %v213, %v218
  %222 = vrot.lane.b32.xlu0 %v220, 32
  %v223 = vpop.permute.xlu0 %222
  %v225 = vadd.f32 %v215, %v223
  %v226 = vtanh.pop %v225
  %228 = vrot.lane.b32.xlu0 %v226, 32
  %v229 = vpop.permute.xlu0 %228
  %v231 = vmul.f32 %v213, %v229
  %v232 = vpack.c.bf16 %v231, %v231
  %234 = vrot.lane.b32.xlu0 %v232, 64
  %v235 = vpop.permute.xlu0 %234
  %v240 = vunpack.c.l.b16 %v53
  %v241 = vunpack.c.l.b16 %v54
  %v242 = vunpack.c.l.b16 %v55
  %v243 = vunpack.c.l.b16 %v56
  %v244 = vpack.c.b16 %v241, %v240
  %v245 = vpack.c.b16 %v243, %v242
  %v249 = vsel %vm152, %v235, 0
  %251 = vmatpush.bf16.msra.mxu0 0
  %252 = vmatpush.bf16.msra.mxu0 0
  %253 = vmatpush.bf16.msra.mxu0 0
  %254 = vmatpush.bf16.msra.mxu0 0
  %255 = vmatpush.bf16.msra.mxu0 0
  %256 = vmatpush.bf16.msra.mxu0 0
  %257 = vmatpush.bf16.msra.mxu0 %v245
  %258 = vmatpush.bf16.msra.mxu0 %v244
  %259 = vmatmul.bf16.gmra.mxu0 %v249
  %v260 = vpop.f32.mrf.mxu0
  %v261 = vadd.f32 %v191, %v260
  %v262 = vpop.f32.mrf.mxu0
  %263 = vdwg.mxu0
  %v264 = vadd.f32 %v261, %v59
  %v265 = vxor.u32 %v264, 2147483648
  %v266 = vmul.f32 %v265, 1.442695
  %v267 = vpow.pop %v266
  %v268 = vadd.f32 %v267, 1.0
  %v269 = vrcp.pop %v268
  %v270 = vmul.f32 %v268, %v269
  %v271 = vsub.f32 1.0, %v270
  %v272 = vmul.f32 %v269, %v271
  %v273 = vadd.f32 %v269, %v272
  %vm274 = vweird.f32 %v268
  %vm275 = vweird.f32 %v269
  %vm276 = vmor %vm274, %vm275
  %v277 = vsel %vm276, %v269, %v273
  %v278 = vand.u32 2147483647, %v268
  %vm279 = vcmp.eq.f32.partialorder %v278, 8.507059e+37
  %v280 = vand.u32 %v268, 2147483648
  %v281 = vor.u32 1.1754944e-38, %v280
  %v282 = vsel %vm279, %v281, %v277
  %v283 = vmul.f32 1.0, %v282
  %v284 = vtanh.pop %v264
  %v285 = vmul.f32 %v283, 0.0
  %287 = vrot.lane.b32.xlu0 %v284, 32
  %v288 = vpop.permute.xlu0 %287
  %v290 = vmul.f32 %v283, %v288
  %292 = vrot.lane.b32.xlu0 %v290, 32
  %v293 = vpop.permute.xlu0 %292
  %v295 = vadd.f32 %v285, %v293
  %v296 = vtanh.pop %v295
  %298 = vrot.lane.b32.xlu0 %v296, 32
  %v299 = vpop.permute.xlu0 %298
  %v301 = vmul.f32 %v283, %v299
  %v302 = vpack.c.bf16 %v301, %v301
  %303 = vmatpush.bf16.msra.mxu0 0
  %304 = vmatpush.bf16.msra.mxu0 0
  %305 = vmatpush.bf16.msra.mxu0 0
  %306 = vmatpush.bf16.msra.mxu0 0
  %307 = vmatpush.bf16.msra.mxu0 0
  %308 = vmatpush.bf16.msra.mxu0 0
  %309 = vmatpush.bf16.msra.mxu0 %v149
  %310 = vmatpush.bf16.msra.mxu0 %v148
  %311 = vmatmul.bf16.gmra.mxu0 %v249
  %v312 = vpop.f32.mrf.mxu0
  %v313 = vadd.f32 0.0, %v312
  %v314 = vpop.f32.mrf.mxu0
  %315 = vdwg.mxu0
  %317 = vrot.lane.b32.xlu0 %v302, 64
  %v318 = vpop.permute.xlu0 %317
  %v320 = vsel %vm152, %v318, 0
  %322 = vmatpush.bf16.msra.mxu0 0
  %323 = vmatpush.bf16.msra.mxu0 0
  %324 = vmatpush.bf16.msra.mxu0 0
  %325 = vmatpush.bf16.msra.mxu0 0
  %326 = vmatpush.bf16.msra.mxu0 0
  %327 = vmatpush.bf16.msra.mxu0 0
  %328 = vmatpush.bf16.msra.mxu0 %v178
  %329 = vmatpush.bf16.msra.mxu0 %v177
  %330 = vmatmul.bf16.gmra.mxu0 %v320
  %v331 = vpop.f32.mrf.mxu0
  %v332 = vadd.f32 0.0, %v331
  %v333 = vpop.f32.mrf.mxu0
  %334 = vdwg.mxu0
  %v335 = vadd.f32 %v123, %v313
  %v336 = vxor.u32 %v335, 2147483648
  %v337 = vmul.f32 %v336, 1.442695
  %v338 = vpow.pop %v337
  %v339 = vadd.f32 %v338, 1.0
  %v340 = vrcp.pop %v339
  %v341 = vmul.f32 %v339, %v340
  %v342 = vsub.f32 1.0, %v341
  %v343 = vmul.f32 %v340, %v342
  %v344 = vadd.f32 %v340, %v343
  %vm345 = vweird.f32 %v339
  %vm346 = vweird.f32 %v340
  %vm347 = vmor %vm345, %vm346
  %v348 = vsel %vm347, %v340, %v344
  %v349 = vand.u32 2147483647, %v339
  %vm350 = vcmp.eq.f32.partialorder %v349, 8.507059e+37
  %v351 = vand.u32 %v339, 2147483648
  %v352 = vor.u32 1.1754944e-38, %v351
  %v353 = vsel %vm350, %v352, %v348
  %v354 = vmul.f32 1.0, %v353
  %v355 = vtanh.pop %v335
  %v356 = vmul.f32 %v354, %v225
  %358 = vrot.lane.b32.xlu0 %v355, 32
  %v359 = vpop.permute.xlu0 %358
  %v361 = vmul.f32 %v354, %v359
  %363 = vrot.lane.b32.xlu0 %v361, 32
  %v364 = vpop.permute.xlu0 %363
  %v366 = vadd.f32 %v356, %v364
  %v367 = vtanh.pop %v366
  %369 = vrot.lane.b32.xlu0 %v367, 32
  %v370 = vpop.permute.xlu0 %369
  %v372 = vmul.f32 %v354, %v370
  %v373 = vpack.c.bf16 %v372, %v372
  %375 = vrot.lane.b32.xlu0 %v373, 64
  %v376 = vpop.permute.xlu0 %375
  %v378 = vsel %vm152, %v376, 0
  %380 = vmatpush.bf16.msra.mxu0 0
  %381 = vmatpush.bf16.msra.mxu0 0
  %382 = vmatpush.bf16.msra.mxu0 0
  %383 = vmatpush.bf16.msra.mxu0 0
  %384 = vmatpush.bf16.msra.mxu0 0
  %385 = vmatpush.bf16.msra.mxu0 0
  %386 = vmatpush.bf16.msra.mxu0 %v245
  %387 = vmatpush.bf16.msra.mxu0 %v244
  %388 = vmatmul.bf16.gmra.mxu0 %v378
  %v389 = vpop.f32.mrf.mxu0
  %v390 = vadd.f32 %v332, %v389
  %v391 = vpop.f32.mrf.mxu0
  %392 = vdwg.mxu0
  %v393 = vadd.f32 %v390, %v59
  %v394 = vxor.u32 %v393, 2147483648
  %v395 = vmul.f32 %v394, 1.442695
  %v396 = vpow.pop %v395
  %v397 = vadd.f32 %v396, 1.0
  %v398 = vrcp.pop %v397
  %v399 = vmul.f32 %v397, %v398
  %v400 = vsub.f32 1.0, %v399
  %v401 = vmul.f32 %v398, %v400
  %v402 = vadd.f32 %v398, %v401
  %vm403 = vweird.f32 %v397
  %vm404 = vweird.f32 %v398
  %vm405 = vmor %vm403, %vm404
  %v406 = vsel %vm405, %v398, %v402
  %v407 = vand.u32 2147483647, %v397
  %vm408 = vcmp.eq.f32.partialorder %v407, 8.507059e+37
  %v409 = vand.u32 %v397, 2147483648
  %v410 = vor.u32 1.1754944e-38, %v409
  %v411 = vsel %vm408, %v410, %v406
  %v412 = vmul.f32 1.0, %v411
  %v413 = vtanh.pop %v393
  %v414 = vmul.f32 %v412, %v295
  %416 = vrot.lane.b32.xlu0 %v413, 32
  %v417 = vpop.permute.xlu0 %416
  %v419 = vmul.f32 %v412, %v417
  %421 = vrot.lane.b32.xlu0 %v419, 32
  %v422 = vpop.permute.xlu0 %421
  %v424 = vadd.f32 %v414, %v422
  %v425 = vtanh.pop %v424
  %427 = vrot.lane.b32.xlu0 %v425, 32
  %v428 = vpop.permute.xlu0 %427
  %v430 = vmul.f32 %v412, %v428
  %v431 = vpack.c.bf16 %v430, %v430
  %432 = vmatpush.bf16.msra.mxu0 0
  %433 = vmatpush.bf16.msra.mxu0 0
  %434 = vmatpush.bf16.msra.mxu0 0
  %435 = vmatpush.bf16.msra.mxu0 0
  %436 = vmatpush.bf16.msra.mxu0 0
  %437 = vmatpush.bf16.msra.mxu0 0
  %438 = vmatpush.bf16.msra.mxu0 %v149
  %439 = vmatpush.bf16.msra.mxu0 %v148
  %440 = vmatmul.bf16.gmra.mxu0 %v378
  %v441 = vpop.f32.mrf.mxu0
  %v442 = vadd.f32 0.0, %v441
  %v443 = vpop.f32.mrf.mxu0
  %444 = vdwg.mxu0
  %446 = vrot.lane.b32.xlu0 %v431, 64
  %v447 = vpop.permute.xlu0 %446
  %v449 = vsel %vm152, %v447, 0
  %451 = vmatpush.bf16.msra.mxu0 0
  %452 = vmatpush.bf16.msra.mxu0 0
  %453 = vmatpush.bf16.msra.mxu0 0
  %454 = vmatpush.bf16.msra.mxu0 0
  %455 = vmatpush.bf16.msra.mxu0 0
  %456 = vmatpush.bf16.msra.mxu0 0
  %457 = vmatpush.bf16.msra.mxu0 %v178
  %458 = vmatpush.bf16.msra.mxu0 %v177
  %459 = vmatmul.bf16.gmra.mxu0 %v449
  %v460 = vpop.f32.mrf.mxu0
  %v461 = vadd.f32 0.0, %v460
  %v462 = vpop.f32.mrf.mxu0
  %463 = vdwg.mxu0
  %v464 = vadd.f32 %v126, %v442
  %v465 = vxor.u32 %v464, 2147483648
  %v466 = vmul.f32 %v465, 1.442695
  %v467 = vpow.pop %v466
  %v468 = vadd.f32 %v467, 1.0
  %v469 = vrcp.pop %v468
  %v470 = vmul.f32 %v468, %v469
  %v471 = vsub.f32 1.0, %v470
  %v472 = vmul.f32 %v469, %v471
  %v473 = vadd.f32 %v469, %v472
  %vm474 = vweird.f32 %v468
  %vm475 = vweird.f32 %v469
  %vm476 = vmor %vm474, %vm475
  %v477 = vsel %vm476, %v469, %v473
  %v478 = vand.u32 2147483647, %v468
  %vm479 = vcmp.eq.f32.partialorder %v478, 8.507059e+37
  %v480 = vand.u32 %v468, 2147483648
  %v481 = vor.u32 1.1754944e-38, %v480
  %v482 = vsel %vm479, %v481, %v477
  %v483 = vmul.f32 1.0, %v482
  %v484 = vtanh.pop %v464
  %v485 = vmul.f32 %v483, %v366
  %487 = vrot.lane.b32.xlu0 %v484, 32
  %v488 = vpop.permute.xlu0 %487
  %v490 = vmul.f32 %v483, %v488
  %492 = vrot.lane.b32.xlu0 %v490, 32
  %v493 = vpop.permute.xlu0 %492
  %v495 = vadd.f32 %v485, %v493
  %v496 = vtanh.pop %v495
  %498 = vrot.lane.b32.xlu0 %v496, 32
  %v499 = vpop.permute.xlu0 %498
  %v501 = vmul.f32 %v483, %v499
  %v502 = vpack.c.bf16 %v501, %v501
  %504 = vrot.lane.b32.xlu0 %v502, 64
  %v505 = vpop.permute.xlu0 %504
  %v507 = vsel %vm152, %v505, 0
  %509 = vmatpush.bf16.msra.mxu0 0
  %510 = vmatpush.bf16.msra.mxu0 0
  %511 = vmatpush.bf16.msra.mxu0 0
  %512 = vmatpush.bf16.msra.mxu0 0
  %513 = vmatpush.bf16.msra.mxu0 0
  %514 = vmatpush.bf16.msra.mxu0 0
  %515 = vmatpush.bf16.msra.mxu0 %v245
  %516 = vmatpush.bf16.msra.mxu0 %v244
  %517 = vmatmul.bf16.gmra.mxu0 %v507
  %v518 = vpop.f32.mrf.mxu0
  %v519 = vadd.f32 %v461, %v518
  %v520 = vpop.f32.mrf.mxu0
  %521 = vdwg.mxu0
  %v522 = vadd.f32 %v519, %v59
  %v523 = vxor.u32 %v522, 2147483648
  %v524 = vmul.f32 %v523, 1.442695
  %v525 = vpow.pop %v524
  %v526 = vadd.f32 %v525, 1.0
  %v527 = vrcp.pop %v526
  %v528 = vmul.f32 %v526, %v527
  %v529 = vsub.f32 1.0, %v528
  %v530 = vmul.f32 %v527, %v529
  %v531 = vadd.f32 %v527, %v530
  %vm532 = vweird.f32 %v526
  %vm533 = vweird.f32 %v527
  %vm534 = vmor %vm532, %vm533
  %v535 = vsel %vm534, %v527, %v531
  %v536 = vand.u32 2147483647, %v526
  %vm537 = vcmp.eq.f32.partialorder %v536, 8.507059e+37
  %v538 = vand.u32 %v526, 2147483648
  %v539 = vor.u32 1.1754944e-38, %v538
  %v540 = vsel %vm537, %v539, %v535
  %v541 = vmul.f32 1.0, %v540
  %v542 = vtanh.pop %v522
  %v543 = vmul.f32 %v541, %v424
  %545 = vrot.lane.b32.xlu0 %v542, 32
  %v546 = vpop.permute.xlu0 %545
  %v548 = vmul.f32 %v541, %v546
  %550 = vrot.lane.b32.xlu0 %v548, 32
  %v551 = vpop.permute.xlu0 %550
  %v553 = vadd.f32 %v543, %v551
  %v554 = vtanh.pop %v553
  %556 = vrot.lane.b32.xlu0 %v554, 32
  %v557 = vpop.permute.xlu0 %556
  %v559 = vmul.f32 %v541, %v557
  %v560 = vpack.c.bf16 %v559, %v559
  %561 = vmatpush.bf16.msra.mxu0 0
  %562 = vmatpush.bf16.msra.mxu0 0
  %563 = vmatpush.bf16.msra.mxu0 0
  %564 = vmatpush.bf16.msra.mxu0 0
  %565 = vmatpush.bf16.msra.mxu0 0
  %566 = vmatpush.bf16.msra.mxu0 0
  %567 = vmatpush.bf16.msra.mxu0 %v149
  %568 = vmatpush.bf16.msra.mxu0 %v148
  %569 = vmatmul.bf16.gmra.mxu0 %v507
  %v570 = vpop.f32.mrf.mxu0
  %v571 = vadd.f32 0.0, %v570
  %v572 = vpop.f32.mrf.mxu0
  %573 = vdwg.mxu0
  %575 = vrot.lane.b32.xlu0 %v560, 64
  %v576 = vpop.permute.xlu0 %575
  %v578 = vsel %vm152, %v576, 0
  %580 = vmatpush.bf16.msra.mxu0 0
  %581 = vmatpush.bf16.msra.mxu0 0
  %582 = vmatpush.bf16.msra.mxu0 0
  %583 = vmatpush.bf16.msra.mxu0 0
  %584 = vmatpush.bf16.msra.mxu0 0
  %585 = vmatpush.bf16.msra.mxu0 0
  %586 = vmatpush.bf16.msra.mxu0 %v178
  %587 = vmatpush.bf16.msra.mxu0 %v177
  %588 = vmatmul.bf16.gmra.mxu0 %v578
  %v589 = vpop.f32.mrf.mxu0
  %v590 = vadd.f32 0.0, %v589
  %v591 = vpop.f32.mrf.mxu0
  %592 = vdwg.mxu0
  %v593 = vadd.f32 %v128, %v571
  %v594 = vxor.u32 %v593, 2147483648
  %v595 = vmul.f32 %v594, 1.442695
  %v596 = vpow.pop %v595
  %v597 = vadd.f32 %v596, 1.0
  %v598 = vrcp.pop %v597
  %v599 = vmul.f32 %v597, %v598
  %v600 = vsub.f32 1.0, %v599
  %v601 = vmul.f32 %v598, %v600
  %v602 = vadd.f32 %v598, %v601
  %vm603 = vweird.f32 %v597
  %vm604 = vweird.f32 %v598
  %vm605 = vmor %vm603, %vm604
  %v606 = vsel %vm605, %v598, %v602
  %v607 = vand.u32 2147483647, %v597
  %vm608 = vcmp.eq.f32.partialorder %v607, 8.507059e+37
  %v609 = vand.u32 %v597, 2147483648
  %v610 = vor.u32 1.1754944e-38, %v609
  %v611 = vsel %vm608, %v610, %v606
  %v612 = vmul.f32 1.0, %v611
  %v613 = vtanh.pop %v593
  %v614 = vmul.f32 %v612, %v495
  %616 = vrot.lane.b32.xlu0 %v613, 32
  %v617 = vpop.permute.xlu0 %616
  %v619 = vmul.f32 %v612, %v617
  %621 = vrot.lane.b32.xlu0 %v619, 32
  %v622 = vpop.permute.xlu0 %621
  %v624 = vadd.f32 %v614, %v622
  %v625 = vtanh.pop %v624
  %627 = vrot.lane.b32.xlu0 %v625, 32
  %v628 = vpop.permute.xlu0 %627
  %v630 = vmul.f32 %v612, %v628
  %v631 = vpack.c.bf16 %v630, %v630
  %633 = vrot.lane.b32.xlu0 %v631, 64
  %v634 = vpop.permute.xlu0 %633
  %v636 = vsel %vm152, %v634, 0
  %638 = vmatpush.bf16.msra.mxu0 0
  %639 = vmatpush.bf16.msra.mxu0 0
  %640 = vmatpush.bf16.msra.mxu0 0
  %641 = vmatpush.bf16.msra.mxu0 0
  %642 = vmatpush.bf16.msra.mxu0 0
  %643 = vmatpush.bf16.msra.mxu0 0
  %644 = vmatpush.bf16.msra.mxu0 %v245
  %645 = vmatpush.bf16.msra.mxu0 %v244
  %646 = vmatmul.bf16.gmra.mxu0 %v636
  %v647 = vpop.f32.mrf.mxu0
  %v648 = vadd.f32 %v590, %v647
  %v649 = vpop.f32.mrf.mxu0
  %650 = vdwg.mxu0
  %v651 = vadd.f32 %v648, %v59
  %v652 = vxor.u32 %v651, 2147483648
  %v653 = vmul.f32 %v652, 1.442695
  %v654 = vpow.pop %v653
  %v655 = vadd.f32 %v654, 1.0
  %v656 = vrcp.pop %v655
  %v657 = vmul.f32 %v655, %v656
  %v658 = vsub.f32 1.0, %v657
  %v659 = vmul.f32 %v656, %v658
  %v660 = vadd.f32 %v656, %v659
  %vm661 = vweird.f32 %v655
  %vm662 = vweird.f32 %v656
  %vm663 = vmor %vm661, %vm662
  %v664 = vsel %vm663, %v656, %v660
  %v665 = vand.u32 2147483647, %v655
  %vm666 = vcmp.eq.f32.partialorder %v665, 8.507059e+37
  %v667 = vand.u32 %v655, 2147483648
  %v668 = vor.u32 1.1754944e-38, %v667
  %v669 = vsel %vm666, %v668, %v664
  %v670 = vmul.f32 1.0, %v669
  %v671 = vtanh.pop %v651
  %v672 = vmul.f32 %v670, %v553
  %674 = vrot.lane.b32.xlu0 %v671, 32
  %v675 = vpop.permute.xlu0 %674
  %v677 = vmul.f32 %v670, %v675
  %679 = vrot.lane.b32.xlu0 %v677, 32
  %v680 = vpop.permute.xlu0 %679
  %v682 = vadd.f32 %v672, %v680
  %v683 = vtanh.pop %v682
  %685 = vrot.lane.b32.xlu0 %v683, 32
  %v686 = vpop.permute.xlu0 %685
  %v688 = vmul.f32 %v670, %v686
  %v689 = vpack.c.bf16 %v688, %v688
  %690 = vmatpush.bf16.msra.mxu0 0
  %691 = vmatpush.bf16.msra.mxu0 0
  %692 = vmatpush.bf16.msra.mxu0 0
  %693 = vmatpush.bf16.msra.mxu0 0
  %694 = vmatpush.bf16.msra.mxu0 0
  %695 = vmatpush.bf16.msra.mxu0 0
  %696 = vmatpush.bf16.msra.mxu0 %v149
  %697 = vmatpush.bf16.msra.mxu0 %v148
  %698 = vmatmul.bf16.gmra.mxu0 %v636
  %v699 = vpop.f32.mrf.mxu0
  %v700 = vadd.f32 0.0, %v699
  %v701 = vpop.f32.mrf.mxu0
  %702 = vdwg.mxu0
  %704 = vrot.lane.b32.xlu0 %v689, 64
  %v705 = vpop.permute.xlu0 %704
  %v707 = vsel %vm152, %v705, 0
  %709 = vmatpush.bf16.msra.mxu0 0
  %710 = vmatpush.bf16.msra.mxu0 0
  %711 = vmatpush.bf16.msra.mxu0 0
  %712 = vmatpush.bf16.msra.mxu0 0
  %713 = vmatpush.bf16.msra.mxu0 0
  %714 = vmatpush.bf16.msra.mxu0 0
  %715 = vmatpush.bf16.msra.mxu0 %v178
  %716 = vmatpush.bf16.msra.mxu0 %v177
  %717 = vmatmul.bf16.gmra.mxu0 %v707
  %v718 = vpop.f32.mrf.mxu0
  %v719 = vadd.f32 0.0, %v718
  %v720 = vpop.f32.mrf.mxu0
  %721 = vdwg.mxu0
  %v722 = vadd.f32 %v131, %v700
  %v723 = vxor.u32 %v722, 2147483648
  %v724 = vmul.f32 %v723, 1.442695
  %v725 = vpow.pop %v724
  %v726 = vadd.f32 %v725, 1.0
  %v727 = vrcp.pop %v726
  %v728 = vmul.f32 %v726, %v727
  %v729 = vsub.f32 1.0, %v728
  %v730 = vmul.f32 %v727, %v729
  %v731 = vadd.f32 %v727, %v730
  %vm732 = vweird.f32 %v726
  %vm733 = vweird.f32 %v727
  %vm734 = vmor %vm732, %vm733
  %v735 = vsel %vm734, %v727, %v731
  %v736 = vand.u32 2147483647, %v726
  %vm737 = vcmp.eq.f32.partialorder %v736, 8.507059e+37
  %v738 = vand.u32 %v726, 2147483648
  %v739 = vor.u32 1.1754944e-38, %v738
  %v740 = vsel %vm737, %v739, %v735
  %v741 = vmul.f32 1.0, %v740
  %v742 = vtanh.pop %v722
  %v743 = vmul.f32 %v741, %v624
  %745 = vrot.lane.b32.xlu0 %v742, 32
  %v746 = vpop.permute.xlu0 %745
  %v748 = vmul.f32 %v741, %v746
  %750 = vrot.lane.b32.xlu0 %v748, 32
  %v751 = vpop.permute.xlu0 %750
  %v753 = vadd.f32 %v743, %v751
  %v754 = vtanh.pop %v753
  %756 = vrot.lane.b32.xlu0 %v754, 32
  %v757 = vpop.permute.xlu0 %756
  %v759 = vmul.f32 %v741, %v757
  %v760 = vpack.c.bf16 %v759, %v759
  %762 = vrot.lane.b32.xlu0 %v760, 64
  %v763 = vpop.permute.xlu0 %762
  %v765 = vsel %vm152, %v763, 0
  %767 = vmatpush.bf16.msra.mxu0 0
  %768 = vmatpush.bf16.msra.mxu0 0
  %769 = vmatpush.bf16.msra.mxu0 0
  %770 = vmatpush.bf16.msra.mxu0 0
  %771 = vmatpush.bf16.msra.mxu0 0
  %772 = vmatpush.bf16.msra.mxu0 0
  %773 = vmatpush.bf16.msra.mxu0 %v245
  %774 = vmatpush.bf16.msra.mxu0 %v244
  %775 = vmatmul.bf16.gmra.mxu0 %v765
  %v776 = vpop.f32.mrf.mxu0
  %v777 = vadd.f32 %v719, %v776
  %v778 = vpop.f32.mrf.mxu0
  %779 = vdwg.mxu0
  %v780 = vadd.f32 %v777, %v59
  %v781 = vxor.u32 %v780, 2147483648
  %v782 = vmul.f32 %v781, 1.442695
  %v783 = vpow.pop %v782
  %v784 = vadd.f32 %v783, 1.0
  %v785 = vrcp.pop %v784
  %v786 = vmul.f32 %v784, %v785
  %v787 = vsub.f32 1.0, %v786
  %v788 = vmul.f32 %v785, %v787
  %v789 = vadd.f32 %v785, %v788
  %vm790 = vweird.f32 %v784
  %vm791 = vweird.f32 %v785
  %vm792 = vmor %vm790, %vm791
  %v793 = vsel %vm792, %v785, %v789
  %v794 = vand.u32 2147483647, %v784
  %vm795 = vcmp.eq.f32.partialorder %v794, 8.507059e+37
  %v796 = vand.u32 %v784, 2147483648
  %v797 = vor.u32 1.1754944e-38, %v796
  %v798 = vsel %vm795, %v797, %v793
  %v799 = vmul.f32 1.0, %v798
  %v800 = vtanh.pop %v780
  %v801 = vmul.f32 %v799, %v682
  %803 = vrot.lane.b32.xlu0 %v800, 32
  %v804 = vpop.permute.xlu0 %803
  %v806 = vmul.f32 %v799, %v804
  %808 = vrot.lane.b32.xlu0 %v806, 32
  %v809 = vpop.permute.xlu0 %808
  %v811 = vadd.f32 %v801, %v809
  %v812 = vtanh.pop %v811
  %814 = vrot.lane.b32.xlu0 %v812, 32
  %v815 = vpop.permute.xlu0 %814
  %v817 = vmul.f32 %v799, %v815
  %v818 = vpack.c.bf16 %v817, %v817
  %819 = vmatpush.bf16.msra.mxu0 0
  %820 = vmatpush.bf16.msra.mxu0 0
  %821 = vmatpush.bf16.msra.mxu0 0
  %822 = vmatpush.bf16.msra.mxu0 0
  %823 = vmatpush.bf16.msra.mxu0 0
  %824 = vmatpush.bf16.msra.mxu0 0
  %825 = vmatpush.bf16.msra.mxu0 %v149
  %826 = vmatpush.bf16.msra.mxu0 %v148
  %827 = vmatmul.bf16.gmra.mxu0 %v765
  %v828 = vpop.f32.mrf.mxu0
  %v829 = vadd.f32 0.0, %v828
  %v830 = vpop.f32.mrf.mxu0
  %831 = vdwg.mxu0
  %833 = vrot.lane.b32.xlu0 %v818, 64
  %v834 = vpop.permute.xlu0 %833
  %v836 = vsel %vm152, %v834, 0
  %838 = vmatpush.bf16.msra.mxu0 0
  %839 = vmatpush.bf16.msra.mxu0 0
  %840 = vmatpush.bf16.msra.mxu0 0
  %841 = vmatpush.bf16.msra.mxu0 0
  %842 = vmatpush.bf16.msra.mxu0 0
  %843 = vmatpush.bf16.msra.mxu0 0
  %844 = vmatpush.bf16.msra.mxu0 %v178
  %845 = vmatpush.bf16.msra.mxu0 %v177
  %846 = vmatmul.bf16.gmra.mxu0 %v836
  %v847 = vpop.f32.mrf.mxu0
  %v848 = vadd.f32 0.0, %v847
  %v849 = vpop.f32.mrf.mxu0
  %850 = vdwg.mxu0
  %v851 = vadd.f32 %v133, %v829
  %v852 = vxor.u32 %v851, 2147483648
  %v853 = vmul.f32 %v852, 1.442695
  %v854 = vpow.pop %v853
  %v855 = vadd.f32 %v854, 1.0
  %v856 = vrcp.pop %v855
  %v857 = vmul.f32 %v855, %v856
  %v858 = vsub.f32 1.0, %v857
  %v859 = vmul.f32 %v856, %v858
  %v860 = vadd.f32 %v856, %v859
  %vm861 = vweird.f32 %v855
  %vm862 = vweird.f32 %v856
  %vm863 = vmor %vm861, %vm862
  %v864 = vsel %vm863, %v856, %v860
  %v865 = vand.u32 2147483647, %v855
  %vm866 = vcmp.eq.f32.partialorder %v865, 8.507059e+37
  %v867 = vand.u32 %v855, 2147483648
  %v868 = vor.u32 1.1754944e-38, %v867
  %v869 = vsel %vm866, %v868, %v864
  %v870 = vmul.f32 1.0, %v869
  %v871 = vtanh.pop %v851
  %v872 = vmul.f32 %v870, %v753
  %874 = vrot.lane.b32.xlu0 %v871, 32
  %v875 = vpop.permute.xlu0 %874
  %v877 = vmul.f32 %v870, %v875
  %879 = vrot.lane.b32.xlu0 %v877, 32
  %v880 = vpop.permute.xlu0 %879
  %v882 = vadd.f32 %v872, %v880
  %v883 = vtanh.pop %v882
  %885 = vrot.lane.b32.xlu0 %v883, 32
  %v886 = vpop.permute.xlu0 %885
  %v888 = vmul.f32 %v870, %v886
  %v889 = vpack.c.bf16 %v888, %v888
  %891 = vrot.lane.b32.xlu0 %v889, 64
  %v892 = vpop.permute.xlu0 %891
  %v894 = vsel %vm152, %v892, 0
  %896 = vmatpush.bf16.msra.mxu0 0
  %897 = vmatpush.bf16.msra.mxu0 0
  %898 = vmatpush.bf16.msra.mxu0 0
  %899 = vmatpush.bf16.msra.mxu0 0
  %900 = vmatpush.bf16.msra.mxu0 0
  %901 = vmatpush.bf16.msra.mxu0 0
  %902 = vmatpush.bf16.msra.mxu0 %v245
  %903 = vmatpush.bf16.msra.mxu0 %v244
  %904 = vmatmul.bf16.gmra.mxu0 %v894
  %v905 = vpop.f32.mrf.mxu0
  %v906 = vadd.f32 %v848, %v905
  %v907 = vpop.f32.mrf.mxu0
  %908 = vdwg.mxu0
  %v909 = vadd.f32 %v906, %v59
  %v910 = vxor.u32 %v909, 2147483648
  %v911 = vmul.f32 %v910, 1.442695
  %v912 = vpow.pop %v911
  %v913 = vadd.f32 %v912, 1.0
  %v914 = vrcp.pop %v913
  %v915 = vmul.f32 %v913, %v914
  %v916 = vsub.f32 1.0, %v915
  %v917 = vmul.f32 %v914, %v916
  %v918 = vadd.f32 %v914, %v917
  %vm919 = vweird.f32 %v913
  %vm920 = vweird.f32 %v914
  %vm921 = vmor %vm919, %vm920
  %v922 = vsel %vm921, %v914, %v918
  %v923 = vand.u32 2147483647, %v913
  %vm924 = vcmp.eq.f32.partialorder %v923, 8.507059e+37
  %v925 = vand.u32 %v913, 2147483648
  %v926 = vor.u32 1.1754944e-38, %v925
  %v927 = vsel %vm924, %v926, %v922
  %v928 = vmul.f32 1.0, %v927
  %v929 = vtanh.pop %v909
  %v930 = vmul.f32 %v928, %v811
  %932 = vrot.lane.b32.xlu0 %v929, 32
  %v933 = vpop.permute.xlu0 %932
  %v935 = vmul.f32 %v928, %v933
  %937 = vrot.lane.b32.xlu0 %v935, 32
  %v938 = vpop.permute.xlu0 %937
  %v940 = vadd.f32 %v930, %v938
  %v941 = vtanh.pop %v940
  %943 = vrot.lane.b32.xlu0 %v941, 32
  %v944 = vpop.permute.xlu0 %943
  %v946 = vmul.f32 %v928, %v944
  %v947 = vpack.c.bf16 %v946, %v946
  %948 = vmatpush.bf16.msra.mxu0 0
  %949 = vmatpush.bf16.msra.mxu0 0
  %950 = vmatpush.bf16.msra.mxu0 0
  %951 = vmatpush.bf16.msra.mxu0 0
  %952 = vmatpush.bf16.msra.mxu0 0
  %953 = vmatpush.bf16.msra.mxu0 0
  %954 = vmatpush.bf16.msra.mxu0 %v149
  %955 = vmatpush.bf16.msra.mxu0 %v148
  %956 = vmatmul.bf16.gmra.mxu0 %v894
  %v957 = vpop.f32.mrf.mxu0
  %v958 = vadd.f32 0.0, %v957
  %v959 = vpop.f32.mrf.mxu0
  %960 = vdwg.mxu0
  %962 = vrot.lane.b32.xlu0 %v947, 64
  %v963 = vpop.permute.xlu0 %962
  %v965 = vsel %vm152, %v963, 0
  %967 = vmatpush.bf16.msra.mxu0 0
  %968 = vmatpush.bf16.msra.mxu0 0
  %969 = vmatpush.bf16.msra.mxu0 0
  %970 = vmatpush.bf16.msra.mxu0 0
  %971 = vmatpush.bf16.msra.mxu0 0
  %972 = vmatpush.bf16.msra.mxu0 0
  %973 = vmatpush.bf16.msra.mxu0 %v178
  %974 = vmatpush.bf16.msra.mxu0 %v177
  %975 = vmatmul.bf16.gmra.mxu0 %v965
  %v976 = vpop.f32.mrf.mxu0
  %v977 = vadd.f32 0.0, %v976
  %v978 = vpop.f32.mrf.mxu0
  %979 = vdwg.mxu0
  %v980 = vadd.f32 %v136, %v958
  %v981 = vxor.u32 %v980, 2147483648
  %v982 = vmul.f32 %v981, 1.442695
  %v983 = vpow.pop %v982
  %v984 = vadd.f32 %v983, 1.0
  %v985 = vrcp.pop %v984
  %v986 = vmul.f32 %v984, %v985
  %v987 = vsub.f32 1.0, %v986
  %v988 = vmul.f32 %v985, %v987
  %v989 = vadd.f32 %v985, %v988
  %vm990 = vweird.f32 %v984
  %vm991 = vweird.f32 %v985
  %vm992 = vmor %vm990, %vm991
  %v993 = vsel %vm992, %v985, %v989
  %v994 = vand.u32 2147483647, %v984
  %vm995 = vcmp.eq.f32.partialorder %v994, 8.507059e+37
  %v996 = vand.u32 %v984, 2147483648
  %v997 = vor.u32 1.1754944e-38, %v996
  %v998 = vsel %vm995, %v997, %v993
  %v999 = vmul.f32 1.0, %v998
  %v1000 = vtanh.pop %v980
  %v1001 = vmul.f32 %v999, %v882
  %1003 = vrot.lane.b32.xlu0 %v1000, 32
  %v1004 = vpop.permute.xlu0 %1003
  %v1006 = vmul.f32 %v999, %v1004
  %1008 = vrot.lane.b32.xlu0 %v1006, 32
  %v1009 = vpop.permute.xlu0 %1008
  %v1011 = vadd.f32 %v1001, %v1009
  %v1012 = vtanh.pop %v1011
  %1014 = vrot.lane.b32.xlu0 %v1012, 32
  %v1015 = vpop.permute.xlu0 %1014
  %v1017 = vmul.f32 %v999, %v1015
  %v1018 = vpack.c.bf16 %v1017, %v1017
  %1020 = vrot.lane.b32.xlu0 %v1018, 64
  %v1021 = vpop.permute.xlu0 %1020
  %v1023 = vsel %vm152, %v1021, 0
  %1025 = vmatpush.bf16.msra.mxu0 0
  %1026 = vmatpush.bf16.msra.mxu0 0
  %1027 = vmatpush.bf16.msra.mxu0 0
  %1028 = vmatpush.bf16.msra.mxu0 0
  %1029 = vmatpush.bf16.msra.mxu0 0
  %1030 = vmatpush.bf16.msra.mxu0 0
  %1031 = vmatpush.bf16.msra.mxu0 %v245
  %1032 = vmatpush.bf16.msra.mxu0 %v244
  %1033 = vmatmul.bf16.gmra.mxu0 %v1023
  %v1034 = vpop.f32.mrf.mxu0
  %v1035 = vadd.f32 %v977, %v1034
  %v1036 = vpop.f32.mrf.mxu0
  %1037 = vdwg.mxu0
  %v1038 = vadd.f32 %v1035, %v59
  %v1039 = vxor.u32 %v1038, 2147483648
  %v1040 = vmul.f32 %v1039, 1.442695
  %v1041 = vpow.pop %v1040
  %v1042 = vadd.f32 %v1041, 1.0
  %v1043 = vrcp.pop %v1042
  %v1044 = vmul.f32 %v1042, %v1043
  %v1045 = vsub.f32 1.0, %v1044
  %v1046 = vmul.f32 %v1043, %v1045
  %v1047 = vadd.f32 %v1043, %v1046
  %vm1048 = vweird.f32 %v1042
  %vm1049 = vweird.f32 %v1043
  %vm1050 = vmor %vm1048, %vm1049
  %v1051 = vsel %vm1050, %v1043, %v1047
  %v1052 = vand.u32 2147483647, %v1042
  %vm1053 = vcmp.eq.f32.partialorder %v1052, 8.507059e+37
  %v1054 = vand.u32 %v1042, 2147483648
  %v1055 = vor.u32 1.1754944e-38, %v1054
  %v1056 = vsel %vm1053, %v1055, %v1051
  %v1057 = vmul.f32 1.0, %v1056
  %v1058 = vtanh.pop %v1038
  %v1059 = vmul.f32 %v1057, %v940
  %1061 = vrot.lane.b32.xlu0 %v1058, 32
  %v1062 = vpop.permute.xlu0 %1061
  %v1064 = vmul.f32 %v1057, %v1062
  %1066 = vrot.lane.b32.xlu0 %v1064, 32
  %v1067 = vpop.permute.xlu0 %1066
  %v1069 = vadd.f32 %v1059, %v1067
  %v1070 = vtanh.pop %v1069
  %1072 = vrot.lane.b32.xlu0 %v1070, 32
  %v1073 = vpop.permute.xlu0 %1072
  %v1075 = vmul.f32 %v1057, %v1073
  %v1076 = vpack.c.bf16 %v1075, %v1075
  %1077 = vmatpush.bf16.msra.mxu0 0
  %1078 = vmatpush.bf16.msra.mxu0 0
  %1079 = vmatpush.bf16.msra.mxu0 0
  %1080 = vmatpush.bf16.msra.mxu0 0
  %1081 = vmatpush.bf16.msra.mxu0 0
  %1082 = vmatpush.bf16.msra.mxu0 0
  %1083 = vmatpush.bf16.msra.mxu0 %v149
  %1084 = vmatpush.bf16.msra.mxu0 %v148
  %1085 = vmatmul.bf16.gmra.mxu0 %v1023
  %v1086 = vpop.f32.mrf.mxu0
  %v1087 = vadd.f32 0.0, %v1086
  %v1088 = vpop.f32.mrf.mxu0
  %1089 = vdwg.mxu0
  %1091 = vrot.lane.b32.xlu0 %v1076, 64
  %v1092 = vpop.permute.xlu0 %1091
  %v1094 = vsel %vm152, %v1092, 0
  %1096 = vmatpush.bf16.msra.mxu0 0
  %1097 = vmatpush.bf16.msra.mxu0 0
  %1098 = vmatpush.bf16.msra.mxu0 0
  %1099 = vmatpush.bf16.msra.mxu0 0
  %1100 = vmatpush.bf16.msra.mxu0 0
  %1101 = vmatpush.bf16.msra.mxu0 0
  %1102 = vmatpush.bf16.msra.mxu0 %v178
  %1103 = vmatpush.bf16.msra.mxu0 %v177
  %1104 = vmatmul.bf16.gmra.mxu0 %v1094
  %v1105 = vpop.f32.mrf.mxu0
  %v1106 = vadd.f32 0.0, %v1105
  %v1107 = vpop.f32.mrf.mxu0
  %1108 = vdwg.mxu0
  %v1109 = vadd.f32 %v138, %v1087
  %v1110 = vxor.u32 %v1109, 2147483648
  %v1111 = vmul.f32 %v1110, 1.442695
  %v1112 = vpow.pop %v1111
  %v1113 = vadd.f32 %v1112, 1.0
  %v1114 = vrcp.pop %v1113
  %v1115 = vmul.f32 %v1113, %v1114
  %v1116 = vsub.f32 1.0, %v1115
  %v1117 = vmul.f32 %v1114, %v1116
  %v1118 = vadd.f32 %v1114, %v1117
  %vm1119 = vweird.f32 %v1113
  %vm1120 = vweird.f32 %v1114
  %vm1121 = vmor %vm1119, %vm1120
  %v1122 = vsel %vm1121, %v1114, %v1118
  %v1123 = vand.u32 2147483647, %v1113
  %vm1124 = vcmp.eq.f32.partialorder %v1123, 8.507059e+37
  %v1125 = vand.u32 %v1113, 2147483648
  %v1126 = vor.u32 1.1754944e-38, %v1125
  %v1127 = vsel %vm1124, %v1126, %v1122
  %v1128 = vmul.f32 1.0, %v1127
  %v1129 = vtanh.pop %v1109
  %v1130 = vmul.f32 %v1128, %v1011
  %1132 = vrot.lane.b32.xlu0 %v1129, 32
  %v1133 = vpop.permute.xlu0 %1132
  %v1135 = vmul.f32 %v1128, %v1133
  %1137 = vrot.lane.b32.xlu0 %v1135, 32
  %v1138 = vpop.permute.xlu0 %1137
  %v1140 = vadd.f32 %v1130, %v1138
  %v1141 = vtanh.pop %v1140
  %1143 = vrot.lane.b32.xlu0 %v1141, 32
  %v1144 = vpop.permute.xlu0 %1143
  %v1146 = vmul.f32 %v1128, %v1144
  %v1147 = vpack.c.bf16 %v1146, %v1146
  %1149 = vrot.lane.b32.xlu0 %v1147, 64
  %v1150 = vpop.permute.xlu0 %1149
  %v1152 = vsel %vm152, %v1150, 0
  %1154 = vmatpush.bf16.msra.mxu0 0
  %1155 = vmatpush.bf16.msra.mxu0 0
  %1156 = vmatpush.bf16.msra.mxu0 0
  %1157 = vmatpush.bf16.msra.mxu0 0
  %1158 = vmatpush.bf16.msra.mxu0 0
  %1159 = vmatpush.bf16.msra.mxu0 0
  %1160 = vmatpush.bf16.msra.mxu0 %v245
  %1161 = vmatpush.bf16.msra.mxu0 %v244
  %1162 = vmatmul.bf16.gmra.mxu0 %v1152
  %v1163 = vpop.f32.mrf.mxu0
  %v1164 = vadd.f32 %v1106, %v1163
  %v1165 = vpop.f32.mrf.mxu0
  %1166 = vdwg.mxu0
  %v1167 = vadd.f32 %v1164, %v59
  %v1168 = vxor.u32 %v1167, 2147483648
  %v1169 = vmul.f32 %v1168, 1.442695
  %v1170 = vpow.pop %v1169
  %v1171 = vadd.f32 %v1170, 1.0
  %v1172 = vrcp.pop %v1171
  %v1173 = vmul.f32 %v1171, %v1172
  %v1174 = vsub.f32 1.0, %v1173
  %v1175 = vmul.f32 %v1172, %v1174
  %v1176 = vadd.f32 %v1172, %v1175
  %vm1177 = vweird.f32 %v1171
  %vm1178 = vweird.f32 %v1172
  %vm1179 = vmor %vm1177, %vm1178
  %v1180 = vsel %vm1179, %v1172, %v1176
  %v1181 = vand.u32 2147483647, %v1171
  %vm1182 = vcmp.eq.f32.partialorder %v1181, 8.507059e+37
  %v1183 = vand.u32 %v1171, 2147483648
  %v1184 = vor.u32 1.1754944e-38, %v1183
  %v1185 = vsel %vm1182, %v1184, %v1180
  %v1186 = vmul.f32 1.0, %v1185
  %v1187 = vtanh.pop %v1167
  %v1188 = vmul.f32 %v1186, %v1069
  %1190 = vrot.lane.b32.xlu0 %v1187, 32
  %v1191 = vpop.permute.xlu0 %1190
  %v1193 = vmul.f32 %v1186, %v1191
  %1195 = vrot.lane.b32.xlu0 %v1193, 32
  %v1196 = vpop.permute.xlu0 %1195
  %v1198 = vadd.f32 %v1188, %v1196
  %v1199 = vtanh.pop %v1198
  %1201 = vrot.lane.b32.xlu0 %v1199, 32
  %v1202 = vpop.permute.xlu0 %1201
  %v1204 = vmul.f32 %v1186, %v1202
  %v1205 = vld [vmem:[%s7] sm:$0xff]
  %v1206 = vld [vmem:[%s7 + $0x8] sm:$0xff]
  %v1207 = vld [vmem:[%s7 + $0x10] sm:$0xff]
  %v1208 = vld [vmem:[%s7 + $0x18] sm:$0xff]
  %v1209 = vld [vmem:[%s8] sm:$0x1]
  %v1211 = vperm.slane %v1209, 0
  %1214 = vrot.lane.b32.xlu0 %v1204, 64
  %v1215 = vpop.permute.xlu0 %1214
  %v1216 = vsel %vm152, %v1215, 0
  %1218 = vmatpush.msra.mxu0 0.0
  %1219 = vmatpush.msra.mxu0 0.0
  %1220 = vmatpush.msra.mxu0 0.0
  %1221 = vmatpush.msra.mxu0 0.0
  %1222 = vmatpush.msra.mxu0 0.0
  %1223 = vmatpush.msra.mxu0 0.0
  %1224 = vmatpush.msra.mxu0 0.0
  %1225 = vmatpush.msra.mxu0 0.0
  %1226 = vmatpush.msra.mxu0 0.0
  %1227 = vmatpush.msra.mxu0 0.0
  %1228 = vmatpush.msra.mxu0 0.0
  %1229 = vmatpush.msra.mxu0 0.0
  %1230 = vmatpush.msra.mxu0 %v1208
  %1231 = vmatpush.msra.mxu0 %v1207
  %1232 = vmatpush.msra.mxu0 %v1206
  %1233 = vmatpush.msra.mxu0 %v1205
  %1234 = vmatmul.f32.gmra.mxu0 %v1216
  %v1235 = vpop.f32.mrf.mxu0
  %v1236 = vadd.f32 %v1211, %v1235
  %1237 = vdwg.mxu0
  %v1238 = vmax.f32 %v1236, 0.0
  %v1239 = vld [vmem:[%s9] sm:$0xff]
  %v1240 = vld [vmem:[%s9 + $0x8] sm:$0xff]
  %v1241 = vld [vmem:[%s9 + $0x10] sm:$0xff]
  %v1242 = vld [vmem:[%s9 + $0x18] sm:$0xff]
  %v1243 = vld [vmem:[%s9 + $0x20] sm:$0xff]
  %v1244 = vld [vmem:[%s9 + $0x28] sm:$0xff]
  %v1245 = vld [vmem:[%s9 + $0x30] sm:$0xff]
  %v1246 = vld [vmem:[%s9 + $0x38] sm:$0xff]
  %v1247 = vld [vmem:[%s9 + $0x40] sm:$0xff]
  %v1248 = vld [vmem:[%s9 + $0x48] sm:$0xff]
  %v1249 = vld [vmem:[%s9 + $0x50] sm:$0xff]
  %v1250 = vld [vmem:[%s9 + $0x58] sm:$0xff]
  %v1251 = vld [vmem:[%s9 + $0x60] sm:$0xff]
  %v1252 = vld [vmem:[%s9 + $0x68] sm:$0xff]
  %v1253 = vld [vmem:[%s9 + $0x70] sm:$0xff]
  %v1254 = vld [vmem:[%s9 + $0x78] sm:$0xff]
  %v1255 = vld [vmem:[%s10] sm:$0x1]
  %v1257 = vperm.slane %v1255, 0
  %1259 = vmatpush.msra.mxu0 %v1254
  %1260 = vmatpush.msra.mxu0 %v1253
  %1261 = vmatpush.msra.mxu0 %v1252
  %1262 = vmatpush.msra.mxu0 %v1251
  %1263 = vmatpush.msra.mxu0 %v1250
  %1264 = vmatpush.msra.mxu0 %v1249
  %1265 = vmatpush.msra.mxu0 %v1248
  %1266 = vmatpush.msra.mxu0 %v1247
  %1267 = vmatpush.msra.mxu0 %v1246
  %1268 = vmatpush.msra.mxu0 %v1245
  %1269 = vmatpush.msra.mxu0 %v1244
  %1270 = vmatpush.msra.mxu0 %v1243
  %1271 = vmatpush.msra.mxu0 %v1242
  %1272 = vmatpush.msra.mxu0 %v1241
  %1273 = vmatpush.msra.mxu0 %v1240
  %1274 = vmatpush.msra.mxu0 %v1239
  %1275 = vmatmul.f32.gmra.mxu0 %v1238
  %v1276 = vpop.f32.mrf.mxu0
  %v1277 = vadd.f32 %v1257, %v1276
  %1278 = vdwg.mxu0
  %v1279 = vmax.f32 %v1277, 0.0
  %v1280 = vld [vmem:[%s11] sm:$0xff]
  %v1281 = vld [vmem:[%s11 + $0x8] sm:$0xff]
  %v1282 = vld [vmem:[%s11 + $0x10] sm:$0xff]
  %v1283 = vld [vmem:[%s11 + $0x18] sm:$0xff]
  %v1284 = vld [vmem:[%s11 + $0x20] sm:$0xff]
  %v1285 = vld [vmem:[%s11 + $0x28] sm:$0xff]
  %v1286 = vld [vmem:[%s11 + $0x30] sm:$0xff]
  %v1287 = vld [vmem:[%s11 + $0x38] sm:$0xff]
  %v1288 = vld [vmem:[%s11 + $0x40] sm:$0xff]
  %v1289 = vld [vmem:[%s11 + $0x48] sm:$0xff]
  %v1290 = vld [vmem:[%s11 + $0x50] sm:$0xff]
  %v1291 = vld [vmem:[%s11 + $0x58] sm:$0xff]
  %v1292 = vld [vmem:[%s11 + $0x60] sm:$0xff]
  %v1293 = vld [vmem:[%s11 + $0x68] sm:$0xff]
  %v1294 = vld [vmem:[%s11 + $0x70] sm:$0xff]
  %v1295 = vld [vmem:[%s11 + $0x78] sm:$0xff]
  %v1296 = vld [vmem:[%s12] sm:$0x1]
  %v1298 = vperm.slane %v1296, 0
  %1300 = vmatpush.msra.mxu0 %v1295
  %1301 = vmatpush.msra.mxu0 %v1294
  %1302 = vmatpush.msra.mxu0 %v1293
  %1303 = vmatpush.msra.mxu0 %v1292
  %1304 = vmatpush.msra.mxu0 %v1291
  %1305 = vmatpush.msra.mxu0 %v1290
  %1306 = vmatpush.msra.mxu0 %v1289
  %1307 = vmatpush.msra.mxu0 %v1288
  %1308 = vmatpush.msra.mxu0 %v1287
  %1309 = vmatpush.msra.mxu0 %v1286
  %1310 = vmatpush.msra.mxu0 %v1285
  %1311 = vmatpush.msra.mxu0 %v1284
  %1312 = vmatpush.msra.mxu0 %v1283
  %1313 = vmatpush.msra.mxu0 %v1282
  %1314 = vmatpush.msra.mxu0 %v1281
  %1315 = vmatpush.msra.mxu0 %v1280
  %1316 = vmatmul.f32.gmra.mxu0 %v1279
  %v1317 = vpop.f32.mrf.mxu0
  %v1318 = vadd.f32 %v1298, %v1317
  %1319 = vdwg.mxu0
  %1320 = vst [vmem:[%s13] sm:$0xff] %v1318
  // Predicated region
  $region54: #{lstm_model_forward.1} parent=0 // pred_check
    _
  $region55: #{lstm_model_forward.1} parent=0 // pred_check_branch
    %1322 = sbr.rel (0) target = $region57
  $region56: #{lstm_model_forward.1} parent=0 // pred_region
    _
  $region57: #{lstm_model_forward.1} parent=0 // pred_fallthru
    _
  // Predicated region
  $region58: #{lstm_model_forward.1} parent=0 // pred_check
    _
  $region59: #{lstm_model_forward.1} parent=0 // pred_check_branch
    %1324 = sbr.rel (0) target = $region61
  $region60: #{lstm_model_forward.1} parent=0 // pred_region
    _
  $region61: #{lstm_model_forward.1} parent=0 // pred_fallthru
    _

</llo_original>
